<compile_context>
chip_gen: v5e
topology: v5e:2x2
jax: 0.10.0
libtpu: 0.0.40
codegen_flags: <defaults>
</compile_context>

<pallas_src>
import jax
import jax.numpy as jnp
from jax.experimental import pallas as pl
from jax.experimental.pallas import tpu as pltpu

CA_K = 3      # ECA channel conv kernel size
SA_K = 7      # spatial attention conv kernel size


def _make_cbam_kernel(H, W, bt):
    HW = H * W
    pad = SA_K // 2

    def kernel(w_sa_ref, w_eca_ref, masks_ref, x_ref, o_ref,
               avg_ref, mx_ref, sa_ref):
        # w_sa_ref : SMEM (2*7*7,) f32   -- spatial conv weights, [ch, i, j] flat
        # w_eca_ref: VMEM (C, C)  f32    -- banded ECA conv matrix (left-multiply)
        # masks_ref: VMEM (14, HW) f32   -- rows 0..6 row-offset validity,
        #                                   rows 7..13 col-offset validity
        # x_ref    : VMEM (bt, C, HW) input block
        # o_ref    : VMEM (bt, C, HW) output block (also stages x*g)
        # avg_ref / mx_ref / sa_ref : VMEM (bt, HW) f32 scratch
        w_eca = w_eca_ref[...]

        # ---- phase 1: channel attention (ECA) + channel-pooled maps, per sample.
        # The gated features x*g are computed exactly once and staged into the
        # output block; only the tiny (1, HW) pooled rows leave this loop.
        for b in range(bt):                                    # static, small
            xb = x_ref[b].astype(jnp.float32)                  # (C, HW) lane-dense
            pooled = jnp.mean(xb, axis=1, keepdims=True)       # (C, 1)
            y = jnp.dot(w_eca, pooled,
                        preferred_element_type=jnp.float32,
                        precision=jax.lax.Precision.HIGHEST)   # (C, 1)
            g = jax.nn.sigmoid(y)                              # (C, 1) channel gate
            xg = xb * g                                        # (C, HW) gated feats
            avg_ref[b:b + 1, :] = jnp.mean(xg, axis=0, keepdims=True)
            mx_ref[b:b + 1, :] = jnp.max(xg, axis=0, keepdims=True)
            o_ref[b] = xg.astype(o_ref.dtype)                  # stage x*g in VMEM

        # ---- phase 2: 7x7 zero-padded spatial conv over [avg, max], batched
        # over all bt samples of the block in the flat lane-dense (bt, HW)
        # layout.  Masks / row rolls hoisted; inner loop is FMA + roll + mask.
        rmask = [masks_ref[i:i + 1, :] for i in range(SA_K)]
        cmask = [masks_ref[SA_K + j:SA_K + j + 1, :] for j in range(SA_K)]
        avg = avg_ref[...]                                     # (bt, HW)
        mx = mx_ref[...]                                       # (bt, HW)

        out = None
        for i in range(SA_K):
            di = i - pad
            if di == 0:
                a_i, m_i = avg, mx                             # no roll / mask needed
            else:
                s = (-di * W) % HW                             # row shift, hoisted
                a_i = rmask[i] * pltpu.roll(avg, s, axis=1)
                m_i = rmask[i] * pltpu.roll(mx, s, axis=1)
            for j in range(SA_K):
                dj = j - pad
                comb = (w_sa_ref[i * SA_K + j] * a_i
                        + w_sa_ref[SA_K * SA_K + i * SA_K + j] * m_i)
                if dj != 0:
                    comb = cmask[j] * pltpu.roll(comb, (-dj) % HW, axis=1)
                out = comb if out is None else out + comb
        sa_ref[...] = jax.nn.sigmoid(out)                      # (bt, HW) spatial gate

        # ---- phase 3: apply the spatial gate to the staged x*g (read-modify-
        # write of the output block; both gates end up applied exactly once).
        for b in range(bt):
            sa_b = sa_ref[b:b + 1, :]                          # (1, HW) view load
            o_ref[b] = (o_ref[b].astype(jnp.float32) * sa_b).astype(o_ref.dtype)

    return kernel


def _eca_conv_matrix(w_ca, C):
    """Zero-padded 1-D conv (k=3) across channels as a banded (C, C) matrix."""
    w_ca = jnp.asarray(w_ca, jnp.float32).reshape(-1)
    d = jnp.arange(C)[None, :] - jnp.arange(C)[:, None]        # c' - c
    m = jnp.zeros((C, C), jnp.float32)
    for k in range(CA_K):
        m = m + jnp.where(d == (k - CA_K // 2), w_ca[k], 0.0)
    return m


def _spatial_valid_masks(H, W):
    """(2*SA_K, H*W) f32: per row/col offset, 1.0 where the shifted pixel is in-bounds."""
    pad = SA_K // 2
    r = jnp.arange(H * W, dtype=jnp.int32) // W
    c = jnp.arange(H * W, dtype=jnp.int32) % W
    rows = [((r + (i - pad) >= 0) & (r + (i - pad) < H)).astype(jnp.float32)
            for i in range(SA_K)]
    cols = [((c + (j - pad) >= 0) & (c + (j - pad) < W)).astype(jnp.float32)
            for j in range(SA_K)]
    return jnp.stack(rows + cols, axis=0)


def cbam_pallas(x, w_ca, w_sa, *, block_batch=None):
    """x: (B, C, H, W); w_ca: (3,) ECA conv1d weights; w_sa: (2, 7, 7) spatial conv weights."""
    B, C, H, W = x.shape
    HW = H * W

    # Lane-dense layout: last dim = H*W (contiguous for NCHW, so this reshape is free).
    x_flat = x.reshape(B, C, HW)

    if block_batch is None:
        per_sample = C * HW * x_flat.dtype.itemsize
        bt = max(1, min(B, (2 << 20) // max(per_sample, 1)))   # ~2 MiB input block cap
        bt = min(bt, 8)                                        # 8 sublanes fill the conv vregs
        while B % bt:                                          # must divide the batch
            bt -= 1
        block_batch = bt
    bt = block_batch
    assert B % bt == 0, "block_batch must divide the batch size"

    # TODO(synk): for very large C*H*W per sample (approaching v7x's 64 MiB VMEM with
    # double-buffered in/out blocks) this single-block-per-sample design needs an
    # H-tiled two-pass variant (pass 1: global pools, pass 2: gating + spatial conv).

    w_sa_flat = jnp.asarray(w_sa, jnp.float32).reshape(-1)     # (98,) -> SMEM scalars
    w_eca = _eca_conv_matrix(w_ca, C)                          # (C, C) -> VMEM
    masks = _spatial_valid_masks(H, W)                         # (14, HW) -> VMEM

    kernel = _make_cbam_kernel(H, W, bt)

    grid_spec = pltpu.PrefetchScalarGridSpec(
        num_scalar_prefetch=1,                                 # w_sa -> SMEM
        grid=(B // bt,),
        in_specs=[
            pl.BlockSpec((C, C), lambda b, *_: (0, 0)),
            pl.BlockSpec((2 * SA_K, HW), lambda b, *_: (0, 0)),
            pl.BlockSpec((bt, C, HW), lambda b, *_: (b, 0, 0)),
        ],
        out_specs=pl.BlockSpec((bt, C, HW), lambda b, *_: (b, 0, 0)),
        scratch_shapes=[pltpu.VMEM((bt, HW), jnp.float32)] * 3,
    )

    itemsize = x_flat.dtype.itemsize
    cost = pl.CostEstimate(
        flops=int(B * HW * (8 * C + 6 * SA_K * SA_K + 24)),
        transcendentals=int(B * (C + HW)),
        bytes_accessed=int(2 * B * C * HW * itemsize
                           + (C * C + 2 * SA_K * HW + 2 * SA_K * SA_K) * 4),
    )

    out = pl.pallas_call(
        kernel,
        out_shape=jax.ShapeDtypeStruct((B, C, HW), x.dtype),
        grid_spec=grid_spec,
        compiler_params=pltpu.CompilerParams(
            dimension_semantics=("parallel",)),
        cost_estimate=cost,
    )(w_sa_flat, w_eca, masks, x_flat)

    return out.reshape(B, C, H, W)


def cbam_reference(x, w_ca, w_sa):
    """Plain-JAX reference mirroring the PyTorch semantics."""
    B, C, H, W = x.shape
    # ECA-style channel attention
    pooled = x.mean(axis=(2, 3))                               # (B, C)
    pp = jnp.pad(pooled, ((0, 0), (CA_K // 2, CA_K // 2)))
    y = sum(w_ca[k] * pp[:, k:k + C] for k in range(CA_K))
    x = x * jax.nn.sigmoid(y)[:, :, None, None]
    # Spatial attention
    avg = x.mean(axis=1, keepdims=True)
    mx = x.max(axis=1, keepdims=True)
    feat = jnp.concatenate([avg, mx], axis=1)                  # (B, 2, H, W)
    conv = jax.lax.conv_general_dilated(
        feat, w_sa[None],                                      # (1, 2, 7, 7)
        window_strides=(1, 1),
        padding=((SA_K // 2, SA_K // 2), (SA_K // 2, SA_K // 2)),
        dimension_numbers=("NCHW", "OIHW", "NCHW"))
    return x * jax.nn.sigmoid(conv)


if __name__ == "__main__":
    B, C, H, W = 2, 4, 16, 16
    key = jax.random.PRNGKey(0)
    kx, kca, ksa = jax.random.split(key, 3)
    x = jax.random.normal(kx, (B, C, H, W), jnp.float32)
    w_ca = jax.random.normal(kca, (CA_K,), jnp.float32) * 0.5
    w_sa = jax.random.normal(ksa, (2, SA_K, SA_K), jnp.float32) * 0.1

    out = cbam_pallas(x, w_ca, w_sa)
    out = jax.block_until_ready(out)

    ref = cbam_reference(x, w_ca, w_sa)
    if not jnp.allclose(out, ref, atol=2e-4, rtol=2e-4):
        max_err = float(jnp.max(jnp.abs(out - ref)))
        raise AssertionError(f"mismatch vs reference, max abs err = {max_err}")

    print("KERNEL_OK")
</pallas_src>

<mosaic_0001>
module attributes {stable_mosaic.version = 11 : i64} {
  func.func @kernel(%arg0: i32, %arg1: memref<98xf32, #tpu.memory_space<smem>>, %arg2: memref<4x4xf32, #tpu.memory_space<vmem>>, %arg3: memref<14x256xf32, #tpu.memory_space<vmem>>, %arg4: memref<2x4x256xf32, #tpu.memory_space<vmem>>, %arg5: memref<2x4x256xf32, #tpu.memory_space<vmem>>, %arg6: memref<2x256xf32, #tpu.memory_space<vmem>>, %arg7: memref<2x256xf32, #tpu.memory_space<vmem>>, %arg8: memref<2x256xf32, #tpu.memory_space<vmem>>) attributes {dimension_semantics = [#tpu.dimension_semantics<parallel>], iteration_bounds = array<i64: 1>, scalar_prefetch = 1 : i64, scratch_operands = 3 : i64, tpu.core_type = #tpu.core_type<tc>, window_params = [{pipeline_mode = #tpu.pipeline_mode<synchronous>, transform_indices = @transform_0, window_bounds = array<i64: 4, 4>}, {pipeline_mode = #tpu.pipeline_mode<synchronous>, transform_indices = @transform_1, window_bounds = array<i64: 14, 256>}, {transform_indices = @transform_2, window_bounds = array<i64: 2, 4, 256>}, {transform_indices = @transform_3, window_bounds = array<i64: 2, 4, 256>}]} {
    %c0 = arith.constant 0 : index
    %c0_0 = arith.constant 0 : index
    %0 = vector.load %arg2[%c0, %c0_0] : memref<4x4xf32, #tpu.memory_space<vmem>>, vector<4x4xf32>
    %c0_1 = arith.constant 0 : index
    %c0_2 = arith.constant 0 : index
    %c0_3 = arith.constant 0 : index
    %1 = vector.load %arg4[%c0_1, %c0_2, %c0_3] : memref<2x4x256xf32, #tpu.memory_space<vmem>>, vector<1x4x256xf32>
    %2 = vector.shape_cast %1 : vector<1x4x256xf32> to vector<4x256xf32>
    %cst = arith.constant dense<0.000000e+00> : vector<4xf32>
    %3 = vector.multi_reduction <add>, %2, %cst [1] : vector<4x256xf32> to vector<4xf32>
    %4 = vector.shape_cast %3 : vector<4xf32> to vector<4x1xf32>
    %cst_4 = arith.constant 2.560000e+02 : f32
    %5 = vector.broadcast %cst_4 : f32 to vector<4x1xf32>
    %6 = arith.divf %4, %5 : vector<4x1xf32>
    %cst_5 = arith.constant dense<0.000000e+00> : vector<4x1xf32>
    %7 = tpu.matmul %0, %6, %cst_5 {dimension_numbers = #tpu.dot_dimension_numbers<[1], [0], [0], [1], [0, 0, 1, 1], [], []>, precision = #tpu.contract_precision<fp32>} : vector<4x4xf32>, vector<4x1xf32>, vector<4x1xf32> -> vector<4x1xf32>
    %8 = arith.negf %7 : vector<4x1xf32>
    %9 = math.exp %8 : vector<4x1xf32>
    %cst_6 = arith.constant 1.000000e+00 : f32
    %10 = vector.broadcast %cst_6 : f32 to vector<4x1xf32>
    %11 = arith.addf %10, %9 : vector<4x1xf32>
    %12 = arith.divf %10, %11 : vector<4x1xf32>
    %13 = vector.broadcast %12 : vector<4x1xf32> to vector<4x256xf32>
    %14 = arith.mulf %2, %13 : vector<4x256xf32>
    %cst_7 = arith.constant dense<0.000000e+00> : vector<256xf32>
    %15 = vector.multi_reduction <add>, %14, %cst_7 [0] : vector<4x256xf32> to vector<256xf32>
    %16 = vector.shape_cast %15 : vector<256xf32> to vector<1x256xf32>
    %cst_8 = arith.constant 4.000000e+00 : f32
    %17 = vector.broadcast %cst_8 : f32 to vector<1x256xf32>
    %18 = arith.divf %16, %17 : vector<1x256xf32>
    %c0_9 = arith.constant 0 : index
    %c0_10 = arith.constant 0 : index
    %19 = vector.load %arg6[%c0_9, %c0_10] : memref<2x256xf32, #tpu.memory_space<vmem>>, vector<1x256xf32>
    tpu.vector_store %arg6[%c0_9, %c0_10], %18 {strides = array<i32>} : memref<2x256xf32, #tpu.memory_space<vmem>>, vector<1x256xf32>,
    %cst_11 = arith.constant dense<0xFF800000> : vector<256xf32>
    %20 = vector.multi_reduction <maximumf>, %14, %cst_11 [0] : vector<4x256xf32> to vector<256xf32>
    %21 = vector.shape_cast %20 : vector<256xf32> to vector<1x256xf32>
    %c0_12 = arith.constant 0 : index
    %c0_13 = arith.constant 0 : index
    %22 = vector.load %arg7[%c0_12, %c0_13] : memref<2x256xf32, #tpu.memory_space<vmem>>, vector<1x256xf32>
    tpu.vector_store %arg7[%c0_12, %c0_13], %21 {strides = array<i32>} : memref<2x256xf32, #tpu.memory_space<vmem>>, vector<1x256xf32>,
    %c0_14 = arith.constant 0 : index
    %c0_15 = arith.constant 0 : index
    %c0_16 = arith.constant 0 : index
    %23 = vector.load %arg5[%c0_14, %c0_15, %c0_16] : memref<2x4x256xf32, #tpu.memory_space<vmem>>, vector<1x4x256xf32>
    %24 = vector.shape_cast %23 : vector<1x4x256xf32> to vector<4x256xf32>
    %25 = vector.shape_cast %14 : vector<4x256xf32> to vector<1x4x256xf32>
    tpu.vector_store %arg5[%c0_14, %c0_15, %c0_16], %25 {strides = array<i32>} : memref<2x4x256xf32, #tpu.memory_space<vmem>>, vector<1x4x256xf32>,
    %c1 = arith.constant 1 : index
    %c0_17 = arith.constant 0 : index
    %c0_18 = arith.constant 0 : index
    %26 = vector.load %arg4[%c1, %c0_17, %c0_18] : memref<2x4x256xf32, #tpu.memory_space<vmem>>, vector<1x4x256xf32>
    %27 = vector.shape_cast %26 : vector<1x4x256xf32> to vector<4x256xf32>
    %cst_19 = arith.constant dense<0.000000e+00> : vector<4xf32>
    %28 = vector.multi_reduction <add>, %27, %cst_19 [1] : vector<4x256xf32> to vector<4xf32>
    %29 = vector.shape_cast %28 : vector<4xf32> to vector<4x1xf32>
    %cst_20 = arith.constant 2.560000e+02 : f32
    %30 = vector.broadcast %cst_20 : f32 to vector<4x1xf32>
    %31 = arith.divf %29, %30 : vector<4x1xf32>
    %cst_21 = arith.constant dense<0.000000e+00> : vector<4x1xf32>
    %32 = tpu.matmul %0, %31, %cst_21 {dimension_numbers = #tpu.dot_dimension_numbers<[1], [0], [0], [1], [0, 0, 1, 1], [], []>, precision = #tpu.contract_precision<fp32>} : vector<4x4xf32>, vector<4x1xf32>, vector<4x1xf32> -> vector<4x1xf32>
    %33 = arith.negf %32 : vector<4x1xf32>
    %34 = math.exp %33 : vector<4x1xf32>
    %cst_22 = arith.constant 1.000000e+00 : f32
    %35 = vector.broadcast %cst_22 : f32 to vector<4x1xf32>
    %36 = arith.addf %35, %34 : vector<4x1xf32>
    %37 = arith.divf %35, %36 : vector<4x1xf32>
    %38 = vector.broadcast %37 : vector<4x1xf32> to vector<4x256xf32>
    %39 = arith.mulf %27, %38 : vector<4x256xf32>
    %cst_23 = arith.constant dense<0.000000e+00> : vector<256xf32>
    %40 = vector.multi_reduction <add>, %39, %cst_23 [0] : vector<4x256xf32> to vector<256xf32>
    %41 = vector.shape_cast %40 : vector<256xf32> to vector<1x256xf32>
    %cst_24 = arith.constant 4.000000e+00 : f32
    %42 = vector.broadcast %cst_24 : f32 to vector<1x256xf32>
    %43 = arith.divf %41, %42 : vector<1x256xf32>
    %c1_25 = arith.constant 1 : index
    %c0_26 = arith.constant 0 : index
    %44 = vector.load %arg6[%c1_25, %c0_26] : memref<2x256xf32, #tpu.memory_space<vmem>>, vector<1x256xf32>
    tpu.vector_store %arg6[%c1_25, %c0_26], %43 {strides = array<i32>} : memref<2x256xf32, #tpu.memory_space<vmem>>, vector<1x256xf32>,
    %cst_27 = arith.constant dense<0xFF800000> : vector<256xf32>
    %45 = vector.multi_reduction <maximumf>, %39, %cst_27 [0] : vector<4x256xf32> to vector<256xf32>
    %46 = vector.shape_cast %45 : vector<256xf32> to vector<1x256xf32>
    %c1_28 = arith.constant 1 : index
    %c0_29 = arith.constant 0 : index
    %47 = vector.load %arg7[%c1_28, %c0_29] : memref<2x256xf32, #tpu.memory_space<vmem>>, vector<1x256xf32>
    tpu.vector_store %arg7[%c1_28, %c0_29], %46 {strides = array<i32>} : memref<2x256xf32, #tpu.memory_space<vmem>>, vector<1x256xf32>,
    %c1_30 = arith.constant 1 : index
    %c0_31 = arith.constant 0 : index
    %c0_32 = arith.constant 0 : index
    %48 = vector.load %arg5[%c1_30, %c0_31, %c0_32] : memref<2x4x256xf32, #tpu.memory_space<vmem>>, vector<1x4x256xf32>
    %49 = vector.shape_cast %48 : vector<1x4x256xf32> to vector<4x256xf32>
    %50 = vector.shape_cast %39 : vector<4x256xf32> to vector<1x4x256xf32>
    tpu.vector_store %arg5[%c1_30, %c0_31, %c0_32], %50 {strides = array<i32>} : memref<2x4x256xf32, #tpu.memory_space<vmem>>, vector<1x4x256xf32>,
    %c0_33 = arith.constant 0 : index
    %c0_34 = arith.constant 0 : index
    %51 = vector.load %arg3[%c0_33, %c0_34] : memref<14x256xf32, #tpu.memory_space<vmem>>, vector<1x256xf32>
    %c1_35 = arith.constant 1 : index
    %c0_36 = arith.constant 0 : index
    %52 = vector.load %arg3[%c1_35, %c0_36] : memref<14x256xf32, #tpu.memory_space<vmem>>, vector<1x256xf32>
    %c2 = arith.constant 2 : index
    %c0_37 = arith.constant 0 : index
    %53 = vector.load %arg3[%c2, %c0_37] : memref<14x256xf32, #tpu.memory_space<vmem>>, vector<1x256xf32>
    %c4 = arith.constant 4 : index
    %c0_38 = arith.constant 0 : index
    %54 = vector.load %arg3[%c4, %c0_38] : memref<14x256xf32, #tpu.memory_space<vmem>>, vector<1x256xf32>
    %c5 = arith.constant 5 : index
    %c0_39 = arith.constant 0 : index
    %55 = vector.load %arg3[%c5, %c0_39] : memref<14x256xf32, #tpu.memory_space<vmem>>, vector<1x256xf32>
    %c6 = arith.constant 6 : index
    %c0_40 = arith.constant 0 : index
    %56 = vector.load %arg3[%c6, %c0_40] : memref<14x256xf32, #tpu.memory_space<vmem>>, vector<1x256xf32>
    %c7 = arith.constant 7 : index
    %c0_41 = arith.constant 0 : index
    %57 = vector.load %arg3[%c7, %c0_41] : memref<14x256xf32, #tpu.memory_space<vmem>>, vector<1x256xf32>
    %c8 = arith.constant 8 : index
    %c0_42 = arith.constant 0 : index
    %58 = vector.load %arg3[%c8, %c0_42] : memref<14x256xf32, #tpu.memory_space<vmem>>, vector<1x256xf32>
    %c9 = arith.constant 9 : index
    %c0_43 = arith.constant 0 : index
    %59 = vector.load %arg3[%c9, %c0_43] : memref<14x256xf32, #tpu.memory_space<vmem>>, vector<1x256xf32>
    %c11 = arith.constant 11 : index
    %c0_44 = arith.constant 0 : index
    %60 = vector.load %arg3[%c11, %c0_44] : memref<14x256xf32, #tpu.memory_space<vmem>>, vector<1x256xf32>
    %c12 = arith.constant 12 : index
    %c0_45 = arith.constant 0 : index
    %61 = vector.load %arg3[%c12, %c0_45] : memref<14x256xf32, #tpu.memory_space<vmem>>, vector<1x256xf32>
    %c13 = arith.constant 13 : index
    %c0_46 = arith.constant 0 : index
    %62 = vector.load %arg3[%c13, %c0_46] : memref<14x256xf32, #tpu.memory_space<vmem>>, vector<1x256xf32>
    %c0_47 = arith.constant 0 : index
    %c0_48 = arith.constant 0 : index
    %63 = vector.load %arg6[%c0_47, %c0_48] : memref<2x256xf32, #tpu.memory_space<vmem>>, vector<2x256xf32>
    %c0_49 = arith.constant 0 : index
    %c0_50 = arith.constant 0 : index
    %64 = vector.load %arg7[%c0_49, %c0_50] : memref<2x256xf32, #tpu.memory_space<vmem>>, vector<2x256xf32>
    %c48_i32 = arith.constant 48 : i32
    %65 = tpu.dynamic_rotate %63 by %c48_i32 dim 1 : vector<2x256xf32>, i32 -> vector<2x256xf32>
    %66 = vector.broadcast %51 : vector<1x256xf32> to vector<2x256xf32>
    %67 = arith.mulf %66, %65 : vector<2x256xf32>
    %c48_i32_51 = arith.constant 48 : i32
    %68 = tpu.dynamic_rotate %64 by %c48_i32_51 dim 1 : vector<2x256xf32>, i32 -> vector<2x256xf32>
    %69 = vector.broadcast %51 : vector<1x256xf32> to vector<2x256xf32>
    %70 = arith.mulf %69, %68 : vector<2x256xf32>
    %c0_52 = arith.constant 0 : index
    %71 = memref.load %arg1[%c0_52] : memref<98xf32, #tpu.memory_space<smem>>
    %72 = vector.broadcast %71 : f32 to vector<2x256xf32>
    %73 = arith.mulf %72, %67 : vector<2x256xf32>
    %c49 = arith.constant 49 : index
    %74 = memref.load %arg1[%c49] : memref<98xf32, #tpu.memory_space<smem>>
    %75 = vector.broadcast %74 : f32 to vector<2x256xf32>
    %76 = arith.mulf %75, %70 : vector<2x256xf32>
    %77 = arith.addf %73, %76 : vector<2x256xf32>
    %c3_i32 = arith.constant 3 : i32
    %78 = tpu.dynamic_rotate %77 by %c3_i32 dim 1 : vector<2x256xf32>, i32 -> vector<2x256xf32>
    %79 = vector.broadcast %57 : vector<1x256xf32> to vector<2x256xf32>
    %80 = arith.mulf %79, %78 : vector<2x256xf32>
    %c1_53 = arith.constant 1 : index
    %81 = memref.load %arg1[%c1_53] : memref<98xf32, #tpu.memory_space<smem>>
    %82 = vector.broadcast %81 : f32 to vector<2x256xf32>
    %83 = arith.mulf %82, %67 : vector<2x256xf32>
    %c50 = arith.constant 50 : index
    %84 = memref.load %arg1[%c50] : memref<98xf32, #tpu.memory_space<smem>>
    %85 = vector.broadcast %84 : f32 to vector<2x256xf32>
    %86 = arith.mulf %85, %70 : vector<2x256xf32>
    %87 = arith.addf %83, %86 : vector<2x256xf32>
    %c2_i32 = arith.constant 2 : i32
    %88 = tpu.dynamic_rotate %87 by %c2_i32 dim 1 : vector<2x256xf32>, i32 -> vector<2x256xf32>
    %89 = vector.broadcast %58 : vector<1x256xf32> to vector<2x256xf32>
    %90 = arith.mulf %89, %88 : vector<2x256xf32>
    %91 = arith.addf %80, %90 : vector<2x256xf32>
    %c2_54 = arith.constant 2 : index
    %92 = memref.load %arg1[%c2_54] : memref<98xf32, #tpu.memory_space<smem>>
    %93 = vector.broadcast %92 : f32 to vector<2x256xf32>
    %94 = arith.mulf %93, %67 : vector<2x256xf32>
    %c51 = arith.constant 51 : index
    %95 = memref.load %arg1[%c51] : memref<98xf32, #tpu.memory_space<smem>>
    %96 = vector.broadcast %95 : f32 to vector<2x256xf32>
    %97 = arith.mulf %96, %70 : vector<2x256xf32>
    %98 = arith.addf %94, %97 : vector<2x256xf32>
    %c1_i32 = arith.constant 1 : i32
    %99 = tpu.dynamic_rotate %98 by %c1_i32 dim 1 : vector<2x256xf32>, i32 -> vector<2x256xf32>
    %100 = vector.broadcast %59 : vector<1x256xf32> to vector<2x256xf32>
    %101 = arith.mulf %100, %99 : vector<2x256xf32>
    %102 = arith.addf %91, %101 : vector<2x256xf32>
    %c3 = arith.constant 3 : index
    %103 = memref.load %arg1[%c3] : memref<98xf32, #tpu.memory_space<smem>>
    %104 = vector.broadcast %103 : f32 to vector<2x256xf32>
    %105 = arith.mulf %104, %67 : vector<2x256xf32>
    %c52 = arith.constant 52 : index
    %106 = memref.load %arg1[%c52] : memref<98xf32, #tpu.memory_space<smem>>
    %107 = vector.broadcast %106 : f32 to vector<2x256xf32>
    %108 = arith.mulf %107, %70 : vector<2x256xf32>
    %109 = arith.addf %105, %108 : vector<2x256xf32>
    %110 = arith.addf %102, %109 : vector<2x256xf32>
    %c4_55 = arith.constant 4 : index
    %111 = memref.load %arg1[%c4_55] : memref<98xf32, #tpu.memory_space<smem>>
    %112 = vector.broadcast %111 : f32 to vector<2x256xf32>
    %113 = arith.mulf %112, %67 : vector<2x256xf32>
    %c53 = arith.constant 53 : index
    %114 = memref.load %arg1[%c53] : memref<98xf32, #tpu.memory_space<smem>>
    %115 = vector.broadcast %114 : f32 to vector<2x256xf32>
    %116 = arith.mulf %115, %70 : vector<2x256xf32>
    %117 = arith.addf %113, %116 : vector<2x256xf32>
    %c255_i32 = arith.constant 255 : i32
    %118 = tpu.dynamic_rotate %117 by %c255_i32 dim 1 : vector<2x256xf32>, i32 -> vector<2x256xf32>
    %119 = vector.broadcast %60 : vector<1x256xf32> to vector<2x256xf32>
    %120 = arith.mulf %119, %118 : vector<2x256xf32>
    %121 = arith.addf %110, %120 : vector<2x256xf32>
    %c5_56 = arith.constant 5 : index
    %122 = memref.load %arg1[%c5_56] : memref<98xf32, #tpu.memory_space<smem>>
    %123 = vector.broadcast %122 : f32 to vector<2x256xf32>
    %124 = arith.mulf %123, %67 : vector<2x256xf32>
    %c54 = arith.constant 54 : index
    %125 = memref.load %arg1[%c54] : memref<98xf32, #tpu.memory_space<smem>>
    %126 = vector.broadcast %125 : f32 to vector<2x256xf32>
    %127 = arith.mulf %126, %70 : vector<2x256xf32>
    %128 = arith.addf %124, %127 : vector<2x256xf32>
    %c254_i32 = arith.constant 254 : i32
    %129 = tpu.dynamic_rotate %128 by %c254_i32 dim 1 : vector<2x256xf32>, i32 -> vector<2x256xf32>
    %130 = vector.broadcast %61 : vector<1x256xf32> to vector<2x256xf32>
    %131 = arith.mulf %130, %129 : vector<2x256xf32>
    %132 = arith.addf %121, %131 : vector<2x256xf32>
    %c6_57 = arith.constant 6 : index
    %133 = memref.load %arg1[%c6_57] : memref<98xf32, #tpu.memory_space<smem>>
    %134 = vector.broadcast %133 : f32 to vector<2x256xf32>
    %135 = arith.mulf %134, %67 : vector<2x256xf32>
    %c55 = arith.constant 55 : index
    %136 = memref.load %arg1[%c55] : memref<98xf32, #tpu.memory_space<smem>>
    %137 = vector.broadcast %136 : f32 to vector<2x256xf32>
    %138 = arith.mulf %137, %70 : vector<2x256xf32>
    %139 = arith.addf %135, %138 : vector<2x256xf32>
    %c253_i32 = arith.constant 253 : i32
    %140 = tpu.dynamic_rotate %139 by %c253_i32 dim 1 : vector<2x256xf32>, i32 -> vector<2x256xf32>
    %141 = vector.broadcast %62 : vector<1x256xf32> to vector<2x256xf32>
    %142 = arith.mulf %141, %140 : vector<2x256xf32>
    %143 = arith.addf %132, %142 : vector<2x256xf32>
    %c32_i32 = arith.constant 32 : i32
    %144 = tpu.dynamic_rotate %63 by %c32_i32 dim 1 : vector<2x256xf32>, i32 -> vector<2x256xf32>
    %145 = vector.broadcast %52 : vector<1x256xf32> to vector<2x256xf32>
    %146 = arith.mulf %145, %144 : vector<2x256xf32>
    %c32_i32_58 = arith.constant 32 : i32
    %147 = tpu.dynamic_rotate %64 by %c32_i32_58 dim 1 : vector<2x256xf32>, i32 -> vector<2x256xf32>
    %148 = vector.broadcast %52 : vector<1x256xf32> to vector<2x256xf32>
    %149 = arith.mulf %148, %147 : vector<2x256xf32>
    %c7_59 = arith.constant 7 : index
    %150 = memref.load %arg1[%c7_59] : memref<98xf32, #tpu.memory_space<smem>>
    %151 = vector.broadcast %150 : f32 to vector<2x256xf32>
    %152 = arith.mulf %151, %146 : vector<2x256xf32>
    %c56 = arith.constant 56 : index
    %153 = memref.load %arg1[%c56] : memref<98xf32, #tpu.memory_space<smem>>
    %154 = vector.broadcast %153 : f32 to vector<2x256xf32>
    %155 = arith.mulf %154, %149 : vector<2x256xf32>
    %156 = arith.addf %152, %155 : vector<2x256xf32>
    %c3_i32_60 = arith.constant 3 : i32
    %157 = tpu.dynamic_rotate %156 by %c3_i32_60 dim 1 : vector<2x256xf32>, i32 -> vector<2x256xf32>
    %158 = vector.broadcast %57 : vector<1x256xf32> to vector<2x256xf32>
    %159 = arith.mulf %158, %157 : vector<2x256xf32>
    %160 = arith.addf %143, %159 : vector<2x256xf32>
    %c8_61 = arith.constant 8 : index
    %161 = memref.load %arg1[%c8_61] : memref<98xf32, #tpu.memory_space<smem>>
    %162 = vector.broadcast %161 : f32 to vector<2x256xf32>
    %163 = arith.mulf %162, %146 : vector<2x256xf32>
    %c57 = arith.constant 57 : index
    %164 = memref.load %arg1[%c57] : memref<98xf32, #tpu.memory_space<smem>>
    %165 = vector.broadcast %164 : f32 to vector<2x256xf32>
    %166 = arith.mulf %165, %149 : vector<2x256xf32>
    %167 = arith.addf %163, %166 : vector<2x256xf32>
    %c2_i32_62 = arith.constant 2 : i32
    %168 = tpu.dynamic_rotate %167 by %c2_i32_62 dim 1 : vector<2x256xf32>, i32 -> vector<2x256xf32>
    %169 = vector.broadcast %58 : vector<1x256xf32> to vector<2x256xf32>
    %170 = arith.mulf %169, %168 : vector<2x256xf32>
    %171 = arith.addf %160, %170 : vector<2x256xf32>
    %c9_63 = arith.constant 9 : index
    %172 = memref.load %arg1[%c9_63] : memref<98xf32, #tpu.memory_space<smem>>
    %173 = vector.broadcast %172 : f32 to vector<2x256xf32>
    %174 = arith.mulf %173, %146 : vector<2x256xf32>
    %c58 = arith.constant 58 : index
    %175 = memref.load %arg1[%c58] : memref<98xf32, #tpu.memory_space<smem>>
    %176 = vector.broadcast %175 : f32 to vector<2x256xf32>
    %177 = arith.mulf %176, %149 : vector<2x256xf32>
    %178 = arith.addf %174, %177 : vector<2x256xf32>
    %c1_i32_64 = arith.constant 1 : i32
    %179 = tpu.dynamic_rotate %178 by %c1_i32_64 dim 1 : vector<2x256xf32>, i32 -> vector<2x256xf32>
    %180 = vector.broadcast %59 : vector<1x256xf32> to vector<2x256xf32>
    %181 = arith.mulf %180, %179 : vector<2x256xf32>
    %182 = arith.addf %171, %181 : vector<2x256xf32>
    %c10 = arith.constant 10 : index
    %183 = memref.load %arg1[%c10] : memref<98xf32, #tpu.memory_space<smem>>
    %184 = vector.broadcast %183 : f32 to vector<2x256xf32>
    %185 = arith.mulf %184, %146 : vector<2x256xf32>
    %c59 = arith.constant 59 : index
    %186 = memref.load %arg1[%c59] : memref<98xf32, #tpu.memory_space<smem>>
    %187 = vector.broadcast %186 : f32 to vector<2x256xf32>
    %188 = arith.mulf %187, %149 : vector<2x256xf32>
    %189 = arith.addf %185, %188 : vector<2x256xf32>
    %190 = arith.addf %182, %189 : vector<2x256xf32>
    %c11_65 = arith.constant 11 : index
    %191 = memref.load %arg1[%c11_65] : memref<98xf32, #tpu.memory_space<smem>>
    %192 = vector.broadcast %191 : f32 to vector<2x256xf32>
    %193 = arith.mulf %192, %146 : vector<2x256xf32>
    %c60 = arith.constant 60 : index
    %194 = memref.load %arg1[%c60] : memref<98xf32, #tpu.memory_space<smem>>
    %195 = vector.broadcast %194 : f32 to vector<2x256xf32>
    %196 = arith.mulf %195, %149 : vector<2x256xf32>
    %197 = arith.addf %193, %196 : vector<2x256xf32>
    %c255_i32_66 = arith.constant 255 : i32
    %198 = tpu.dynamic_rotate %197 by %c255_i32_66 dim 1 : vector<2x256xf32>, i32 -> vector<2x256xf32>
    %199 = vector.broadcast %60 : vector<1x256xf32> to vector<2x256xf32>
    %200 = arith.mulf %199, %198 : vector<2x256xf32>
    %201 = arith.addf %190, %200 : vector<2x256xf32>
    %c12_67 = arith.constant 12 : index
    %202 = memref.load %arg1[%c12_67] : memref<98xf32, #tpu.memory_space<smem>>
    %203 = vector.broadcast %202 : f32 to vector<2x256xf32>
    %204 = arith.mulf %203, %146 : vector<2x256xf32>
    %c61 = arith.constant 61 : index
    %205 = memref.load %arg1[%c61] : memref<98xf32, #tpu.memory_space<smem>>
    %206 = vector.broadcast %205 : f32 to vector<2x256xf32>
    %207 = arith.mulf %206, %149 : vector<2x256xf32>
    %208 = arith.addf %204, %207 : vector<2x256xf32>
    %c254_i32_68 = arith.constant 254 : i32
    %209 = tpu.dynamic_rotate %208 by %c254_i32_68 dim 1 : vector<2x256xf32>, i32 -> vector<2x256xf32>
    %210 = vector.broadcast %61 : vector<1x256xf32> to vector<2x256xf32>
    %211 = arith.mulf %210, %209 : vector<2x256xf32>
    %212 = arith.addf %201, %211 : vector<2x256xf32>
    %c13_69 = arith.constant 13 : index
    %213 = memref.load %arg1[%c13_69] : memref<98xf32, #tpu.memory_space<smem>>
    %214 = vector.broadcast %213 : f32 to vector<2x256xf32>
    %215 = arith.mulf %214, %146 : vector<2x256xf32>
    %c62 = arith.constant 62 : index
    %216 = memref.load %arg1[%c62] : memref<98xf32, #tpu.memory_space<smem>>
    %217 = vector.broadcast %216 : f32 to vector<2x256xf32>
    %218 = arith.mulf %217, %149 : vector<2x256xf32>
    %219 = arith.addf %215, %218 : vector<2x256xf32>
    %c253_i32_70 = arith.constant 253 : i32
    %220 = tpu.dynamic_rotate %219 by %c253_i32_70 dim 1 : vector<2x256xf32>, i32 -> vector<2x256xf32>
    %221 = vector.broadcast %62 : vector<1x256xf32> to vector<2x256xf32>
    %222 = arith.mulf %221, %220 : vector<2x256xf32>
    %223 = arith.addf %212, %222 : vector<2x256xf32>
    %c16_i32 = arith.constant 16 : i32
    %224 = tpu.dynamic_rotate %63 by %c16_i32 dim 1 : vector<2x256xf32>, i32 -> vector<2x256xf32>
    %225 = vector.broadcast %53 : vector<1x256xf32> to vector<2x256xf32>
    %226 = arith.mulf %225, %224 : vector<2x256xf32>
    %c16_i32_71 = arith.constant 16 : i32
    %227 = tpu.dynamic_rotate %64 by %c16_i32_71 dim 1 : vector<2x256xf32>, i32 -> vector<2x256xf32>
    %228 = vector.broadcast %53 : vector<1x256xf32> to vector<2x256xf32>
    %229 = arith.mulf %228, %227 : vector<2x256xf32>
    %c14 = arith.constant 14 : index
    %230 = memref.load %arg1[%c14] : memref<98xf32, #tpu.memory_space<smem>>
    %231 = vector.broadcast %230 : f32 to vector<2x256xf32>
    %232 = arith.mulf %231, %226 : vector<2x256xf32>
    %c63 = arith.constant 63 : index
    %233 = memref.load %arg1[%c63] : memref<98xf32, #tpu.memory_space<smem>>
    %234 = vector.broadcast %233 : f32 to vector<2x256xf32>
    %235 = arith.mulf %234, %229 : vector<2x256xf32>
    %236 = arith.addf %232, %235 : vector<2x256xf32>
    %c3_i32_72 = arith.constant 3 : i32
    %237 = tpu.dynamic_rotate %236 by %c3_i32_72 dim 1 : vector<2x256xf32>, i32 -> vector<2x256xf32>
    %238 = vector.broadcast %57 : vector<1x256xf32> to vector<2x256xf32>
    %239 = arith.mulf %238, %237 : vector<2x256xf32>
    %240 = arith.addf %223, %239 : vector<2x256xf32>
    %c15 = arith.constant 15 : index
    %241 = memref.load %arg1[%c15] : memref<98xf32, #tpu.memory_space<smem>>
    %242 = vector.broadcast %241 : f32 to vector<2x256xf32>
    %243 = arith.mulf %242, %226 : vector<2x256xf32>
    %c64 = arith.constant 64 : index
    %244 = memref.load %arg1[%c64] : memref<98xf32, #tpu.memory_space<smem>>
    %245 = vector.broadcast %244 : f32 to vector<2x256xf32>
    %246 = arith.mulf %245, %229 : vector<2x256xf32>
    %247 = arith.addf %243, %246 : vector<2x256xf32>
    %c2_i32_73 = arith.constant 2 : i32
    %248 = tpu.dynamic_rotate %247 by %c2_i32_73 dim 1 : vector<2x256xf32>, i32 -> vector<2x256xf32>
    %249 = vector.broadcast %58 : vector<1x256xf32> to vector<2x256xf32>
    %250 = arith.mulf %249, %248 : vector<2x256xf32>
    %251 = arith.addf %240, %250 : vector<2x256xf32>
    %c16 = arith.constant 16 : index
    %252 = memref.load %arg1[%c16] : memref<98xf32, #tpu.memory_space<smem>>
    %253 = vector.broadcast %252 : f32 to vector<2x256xf32>
    %254 = arith.mulf %253, %226 : vector<2x256xf32>
    %c65 = arith.constant 65 : index
    %255 = memref.load %arg1[%c65] : memref<98xf32, #tpu.memory_space<smem>>
    %256 = vector.broadcast %255 : f32 to vector<2x256xf32>
    %257 = arith.mulf %256, %229 : vector<2x256xf32>
    %258 = arith.addf %254, %257 : vector<2x256xf32>
    %c1_i32_74 = arith.constant 1 : i32
    %259 = tpu.dynamic_rotate %258 by %c1_i32_74 dim 1 : vector<2x256xf32>, i32 -> vector<2x256xf32>
    %260 = vector.broadcast %59 : vector<1x256xf32> to vector<2x256xf32>
    %261 = arith.mulf %260, %259 : vector<2x256xf32>
    %262 = arith.addf %251, %261 : vector<2x256xf32>
    %c17 = arith.constant 17 : index
    %263 = memref.load %arg1[%c17] : memref<98xf32, #tpu.memory_space<smem>>
    %264 = vector.broadcast %263 : f32 to vector<2x256xf32>
    %265 = arith.mulf %264, %226 : vector<2x256xf32>
    %c66 = arith.constant 66 : index
    %266 = memref.load %arg1[%c66] : memref<98xf32, #tpu.memory_space<smem>>
    %267 = vector.broadcast %266 : f32 to vector<2x256xf32>
    %268 = arith.mulf %267, %229 : vector<2x256xf32>
    %269 = arith.addf %265, %268 : vector<2x256xf32>
    %270 = arith.addf %262, %269 : vector<2x256xf32>
    %c18 = arith.constant 18 : index
    %271 = memref.load %arg1[%c18] : memref<98xf32, #tpu.memory_space<smem>>
    %272 = vector.broadcast %271 : f32 to vector<2x256xf32>
    %273 = arith.mulf %272, %226 : vector<2x256xf32>
    %c67 = arith.constant 67 : index
    %274 = memref.load %arg1[%c67] : memref<98xf32, #tpu.memory_space<smem>>
    %275 = vector.broadcast %274 : f32 to vector<2x256xf32>
    %276 = arith.mulf %275, %229 : vector<2x256xf32>
    %277 = arith.addf %273, %276 : vector<2x256xf32>
    %c255_i32_75 = arith.constant 255 : i32
    %278 = tpu.dynamic_rotate %277 by %c255_i32_75 dim 1 : vector<2x256xf32>, i32 -> vector<2x256xf32>
    %279 = vector.broadcast %60 : vector<1x256xf32> to vector<2x256xf32>
    %280 = arith.mulf %279, %278 : vector<2x256xf32>
    %281 = arith.addf %270, %280 : vector<2x256xf32>
    %c19 = arith.constant 19 : index
    %282 = memref.load %arg1[%c19] : memref<98xf32, #tpu.memory_space<smem>>
    %283 = vector.broadcast %282 : f32 to vector<2x256xf32>
    %284 = arith.mulf %283, %226 : vector<2x256xf32>
    %c68 = arith.constant 68 : index
    %285 = memref.load %arg1[%c68] : memref<98xf32, #tpu.memory_space<smem>>
    %286 = vector.broadcast %285 : f32 to vector<2x256xf32>
    %287 = arith.mulf %286, %229 : vector<2x256xf32>
    %288 = arith.addf %284, %287 : vector<2x256xf32>
    %c254_i32_76 = arith.constant 254 : i32
    %289 = tpu.dynamic_rotate %288 by %c254_i32_76 dim 1 : vector<2x256xf32>, i32 -> vector<2x256xf32>
    %290 = vector.broadcast %61 : vector<1x256xf32> to vector<2x256xf32>
    %291 = arith.mulf %290, %289 : vector<2x256xf32>
    %292 = arith.addf %281, %291 : vector<2x256xf32>
    %c20 = arith.constant 20 : index
    %293 = memref.load %arg1[%c20] : memref<98xf32, #tpu.memory_space<smem>>
    %294 = vector.broadcast %293 : f32 to vector<2x256xf32>
    %295 = arith.mulf %294, %226 : vector<2x256xf32>
    %c69 = arith.constant 69 : index
    %296 = memref.load %arg1[%c69] : memref<98xf32, #tpu.memory_space<smem>>
    %297 = vector.broadcast %296 : f32 to vector<2x256xf32>
    %298 = arith.mulf %297, %229 : vector<2x256xf32>
    %299 = arith.addf %295, %298 : vector<2x256xf32>
    %c253_i32_77 = arith.constant 253 : i32
    %300 = tpu.dynamic_rotate %299 by %c253_i32_77 dim 1 : vector<2x256xf32>, i32 -> vector<2x256xf32>
    %301 = vector.broadcast %62 : vector<1x256xf32> to vector<2x256xf32>
    %302 = arith.mulf %301, %300 : vector<2x256xf32>
    %303 = arith.addf %292, %302 : vector<2x256xf32>
    %c21 = arith.constant 21 : index
    %304 = memref.load %arg1[%c21] : memref<98xf32, #tpu.memory_space<smem>>
    %305 = vector.broadcast %304 : f32 to vector<2x256xf32>
    %306 = arith.mulf %305, %63 : vector<2x256xf32>
    %c70 = arith.constant 70 : index
    %307 = memref.load %arg1[%c70] : memref<98xf32, #tpu.memory_space<smem>>
    %308 = vector.broadcast %307 : f32 to vector<2x256xf32>
    %309 = arith.mulf %308, %64 : vector<2x256xf32>
    %310 = arith.addf %306, %309 : vector<2x256xf32>
    %c3_i32_78 = arith.constant 3 : i32
    %311 = tpu.dynamic_rotate %310 by %c3_i32_78 dim 1 : vector<2x256xf32>, i32 -> vector<2x256xf32>
    %312 = vector.broadcast %57 : vector<1x256xf32> to vector<2x256xf32>
    %313 = arith.mulf %312, %311 : vector<2x256xf32>
    %314 = arith.addf %303, %313 : vector<2x256xf32>
    %c22 = arith.constant 22 : index
    %315 = memref.load %arg1[%c22] : memref<98xf32, #tpu.memory_space<smem>>
    %316 = vector.broadcast %315 : f32 to vector<2x256xf32>
    %317 = arith.mulf %316, %63 : vector<2x256xf32>
    %c71 = arith.constant 71 : index
    %318 = memref.load %arg1[%c71] : memref<98xf32, #tpu.memory_space<smem>>
    %319 = vector.broadcast %318 : f32 to vector<2x256xf32>
    %320 = arith.mulf %319, %64 : vector<2x256xf32>
    %321 = arith.addf %317, %320 : vector<2x256xf32>
    %c2_i32_79 = arith.constant 2 : i32
    %322 = tpu.dynamic_rotate %321 by %c2_i32_79 dim 1 : vector<2x256xf32>, i32 -> vector<2x256xf32>
    %323 = vector.broadcast %58 : vector<1x256xf32> to vector<2x256xf32>
    %324 = arith.mulf %323, %322 : vector<2x256xf32>
    %325 = arith.addf %314, %324 : vector<2x256xf32>
    %c23 = arith.constant 23 : index
    %326 = memref.load %arg1[%c23] : memref<98xf32, #tpu.memory_space<smem>>
    %327 = vector.broadcast %326 : f32 to vector<2x256xf32>
    %328 = arith.mulf %327, %63 : vector<2x256xf32>
    %c72 = arith.constant 72 : index
    %329 = memref.load %arg1[%c72] : memref<98xf32, #tpu.memory_space<smem>>
    %330 = vector.broadcast %329 : f32 to vector<2x256xf32>
    %331 = arith.mulf %330, %64 : vector<2x256xf32>
    %332 = arith.addf %328, %331 : vector<2x256xf32>
    %c1_i32_80 = arith.constant 1 : i32
    %333 = tpu.dynamic_rotate %332 by %c1_i32_80 dim 1 : vector<2x256xf32>, i32 -> vector<2x256xf32>
    %334 = vector.broadcast %59 : vector<1x256xf32> to vector<2x256xf32>
    %335 = arith.mulf %334, %333 : vector<2x256xf32>
    %336 = arith.addf %325, %335 : vector<2x256xf32>
    %c24 = arith.constant 24 : index
    %337 = memref.load %arg1[%c24] : memref<98xf32, #tpu.memory_space<smem>>
    %338 = vector.broadcast %337 : f32 to vector<2x256xf32>
    %339 = arith.mulf %338, %63 : vector<2x256xf32>
    %c73 = arith.constant 73 : index
    %340 = memref.load %arg1[%c73] : memref<98xf32, #tpu.memory_space<smem>>
    %341 = vector.broadcast %340 : f32 to vector<2x256xf32>
    %342 = arith.mulf %341, %64 : vector<2x256xf32>
    %343 = arith.addf %339, %342 : vector<2x256xf32>
    %344 = arith.addf %336, %343 : vector<2x256xf32>
    %c25 = arith.constant 25 : index
    %345 = memref.load %arg1[%c25] : memref<98xf32, #tpu.memory_space<smem>>
    %346 = vector.broadcast %345 : f32 to vector<2x256xf32>
    %347 = arith.mulf %346, %63 : vector<2x256xf32>
    %c74 = arith.constant 74 : index
    %348 = memref.load %arg1[%c74] : memref<98xf32, #tpu.memory_space<smem>>
    %349 = vector.broadcast %348 : f32 to vector<2x256xf32>
    %350 = arith.mulf %349, %64 : vector<2x256xf32>
    %351 = arith.addf %347, %350 : vector<2x256xf32>
    %c255_i32_81 = arith.constant 255 : i32
    %352 = tpu.dynamic_rotate %351 by %c255_i32_81 dim 1 : vector<2x256xf32>, i32 -> vector<2x256xf32>
    %353 = vector.broadcast %60 : vector<1x256xf32> to vector<2x256xf32>
    %354 = arith.mulf %353, %352 : vector<2x256xf32>
    %355 = arith.addf %344, %354 : vector<2x256xf32>
    %c26 = arith.constant 26 : index
    %356 = memref.load %arg1[%c26] : memref<98xf32, #tpu.memory_space<smem>>
    %357 = vector.broadcast %356 : f32 to vector<2x256xf32>
    %358 = arith.mulf %357, %63 : vector<2x256xf32>
    %c75 = arith.constant 75 : index
    %359 = memref.load %arg1[%c75] : memref<98xf32, #tpu.memory_space<smem>>
    %360 = vector.broadcast %359 : f32 to vector<2x256xf32>
    %361 = arith.mulf %360, %64 : vector<2x256xf32>
    %362 = arith.addf %358, %361 : vector<2x256xf32>
    %c254_i32_82 = arith.constant 254 : i32
    %363 = tpu.dynamic_rotate %362 by %c254_i32_82 dim 1 : vector<2x256xf32>, i32 -> vector<2x256xf32>
    %364 = vector.broadcast %61 : vector<1x256xf32> to vector<2x256xf32>
    %365 = arith.mulf %364, %363 : vector<2x256xf32>
    %366 = arith.addf %355, %365 : vector<2x256xf32>
    %c27 = arith.constant 27 : index
    %367 = memref.load %arg1[%c27] : memref<98xf32, #tpu.memory_space<smem>>
    %368 = vector.broadcast %367 : f32 to vector<2x256xf32>
    %369 = arith.mulf %368, %63 : vector<2x256xf32>
    %c76 = arith.constant 76 : index
    %370 = memref.load %arg1[%c76] : memref<98xf32, #tpu.memory_space<smem>>
    %371 = vector.broadcast %370 : f32 to vector<2x256xf32>
    %372 = arith.mulf %371, %64 : vector<2x256xf32>
    %373 = arith.addf %369, %372 : vector<2x256xf32>
    %c253_i32_83 = arith.constant 253 : i32
    %374 = tpu.dynamic_rotate %373 by %c253_i32_83 dim 1 : vector<2x256xf32>, i32 -> vector<2x256xf32>
    %375 = vector.broadcast %62 : vector<1x256xf32> to vector<2x256xf32>
    %376 = arith.mulf %375, %374 : vector<2x256xf32>
    %377 = arith.addf %366, %376 : vector<2x256xf32>
    %c240_i32 = arith.constant 240 : i32
    %378 = tpu.dynamic_rotate %63 by %c240_i32 dim 1 : vector<2x256xf32>, i32 -> vector<2x256xf32>
    %379 = vector.broadcast %54 : vector<1x256xf32> to vector<2x256xf32>
    %380 = arith.mulf %379, %378 : vector<2x256xf32>
    %c240_i32_84 = arith.constant 240 : i32
    %381 = tpu.dynamic_rotate %64 by %c240_i32_84 dim 1 : vector<2x256xf32>, i32 -> vector<2x256xf32>
    %382 = vector.broadcast %54 : vector<1x256xf32> to vector<2x256xf32>
    %383 = arith.mulf %382, %381 : vector<2x256xf32>
    %c28 = arith.constant 28 : index
    %384 = memref.load %arg1[%c28] : memref<98xf32, #tpu.memory_space<smem>>
    %385 = vector.broadcast %384 : f32 to vector<2x256xf32>
    %386 = arith.mulf %385, %380 : vector<2x256xf32>
    %c77 = arith.constant 77 : index
    %387 = memref.load %arg1[%c77] : memref<98xf32, #tpu.memory_space<smem>>
    %388 = vector.broadcast %387 : f32 to vector<2x256xf32>
    %389 = arith.mulf %388, %383 : vector<2x256xf32>
    %390 = arith.addf %386, %389 : vector<2x256xf32>
    %c3_i32_85 = arith.constant 3 : i32
    %391 = tpu.dynamic_rotate %390 by %c3_i32_85 dim 1 : vector<2x256xf32>, i32 -> vector<2x256xf32>
    %392 = vector.broadcast %57 : vector<1x256xf32> to vector<2x256xf32>
    %393 = arith.mulf %392, %391 : vector<2x256xf32>
    %394 = arith.addf %377, %393 : vector<2x256xf32>
    %c29 = arith.constant 29 : index
    %395 = memref.load %arg1[%c29] : memref<98xf32, #tpu.memory_space<smem>>
    %396 = vector.broadcast %395 : f32 to vector<2x256xf32>
    %397 = arith.mulf %396, %380 : vector<2x256xf32>
    %c78 = arith.constant 78 : index
    %398 = memref.load %arg1[%c78] : memref<98xf32, #tpu.memory_space<smem>>
    %399 = vector.broadcast %398 : f32 to vector<2x256xf32>
    %400 = arith.mulf %399, %383 : vector<2x256xf32>
    %401 = arith.addf %397, %400 : vector<2x256xf32>
    %c2_i32_86 = arith.constant 2 : i32
    %402 = tpu.dynamic_rotate %401 by %c2_i32_86 dim 1 : vector<2x256xf32>, i32 -> vector<2x256xf32>
    %403 = vector.broadcast %58 : vector<1x256xf32> to vector<2x256xf32>
    %404 = arith.mulf %403, %402 : vector<2x256xf32>
    %405 = arith.addf %394, %404 : vector<2x256xf32>
    %c30 = arith.constant 30 : index
    %406 = memref.load %arg1[%c30] : memref<98xf32, #tpu.memory_space<smem>>
    %407 = vector.broadcast %406 : f32 to vector<2x256xf32>
    %408 = arith.mulf %407, %380 : vector<2x256xf32>
    %c79 = arith.constant 79 : index
    %409 = memref.load %arg1[%c79] : memref<98xf32, #tpu.memory_space<smem>>
    %410 = vector.broadcast %409 : f32 to vector<2x256xf32>
    %411 = arith.mulf %410, %383 : vector<2x256xf32>
    %412 = arith.addf %408, %411 : vector<2x256xf32>
    %c1_i32_87 = arith.constant 1 : i32
    %413 = tpu.dynamic_rotate %412 by %c1_i32_87 dim 1 : vector<2x256xf32>, i32 -> vector<2x256xf32>
    %414 = vector.broadcast %59 : vector<1x256xf32> to vector<2x256xf32>
    %415 = arith.mulf %414, %413 : vector<2x256xf32>
    %416 = arith.addf %405, %415 : vector<2x256xf32>
    %c31 = arith.constant 31 : index
    %417 = memref.load %arg1[%c31] : memref<98xf32, #tpu.memory_space<smem>>
    %418 = vector.broadcast %417 : f32 to vector<2x256xf32>
    %419 = arith.mulf %418, %380 : vector<2x256xf32>
    %c80 = arith.constant 80 : index
    %420 = memref.load %arg1[%c80] : memref<98xf32, #tpu.memory_space<smem>>
    %421 = vector.broadcast %420 : f32 to vector<2x256xf32>
    %422 = arith.mulf %421, %383 : vector<2x256xf32>
    %423 = arith.addf %419, %422 : vector<2x256xf32>
    %424 = arith.addf %416, %423 : vector<2x256xf32>
    %c32 = arith.constant 32 : index
    %425 = memref.load %arg1[%c32] : memref<98xf32, #tpu.memory_space<smem>>
    %426 = vector.broadcast %425 : f32 to vector<2x256xf32>
    %427 = arith.mulf %426, %380 : vector<2x256xf32>
    %c81 = arith.constant 81 : index
    %428 = memref.load %arg1[%c81] : memref<98xf32, #tpu.memory_space<smem>>
    %429 = vector.broadcast %428 : f32 to vector<2x256xf32>
    %430 = arith.mulf %429, %383 : vector<2x256xf32>
    %431 = arith.addf %427, %430 : vector<2x256xf32>
    %c255_i32_88 = arith.constant 255 : i32
    %432 = tpu.dynamic_rotate %431 by %c255_i32_88 dim 1 : vector<2x256xf32>, i32 -> vector<2x256xf32>
    %433 = vector.broadcast %60 : vector<1x256xf32> to vector<2x256xf32>
    %434 = arith.mulf %433, %432 : vector<2x256xf32>
    %435 = arith.addf %424, %434 : vector<2x256xf32>
    %c33 = arith.constant 33 : index
    %436 = memref.load %arg1[%c33] : memref<98xf32, #tpu.memory_space<smem>>
    %437 = vector.broadcast %436 : f32 to vector<2x256xf32>
    %438 = arith.mulf %437, %380 : vector<2x256xf32>
    %c82 = arith.constant 82 : index
    %439 = memref.load %arg1[%c82] : memref<98xf32, #tpu.memory_space<smem>>
    %440 = vector.broadcast %439 : f32 to vector<2x256xf32>
    %441 = arith.mulf %440, %383 : vector<2x256xf32>
    %442 = arith.addf %438, %441 : vector<2x256xf32>
    %c254_i32_89 = arith.constant 254 : i32
    %443 = tpu.dynamic_rotate %442 by %c254_i32_89 dim 1 : vector<2x256xf32>, i32 -> vector<2x256xf32>
    %444 = vector.broadcast %61 : vector<1x256xf32> to vector<2x256xf32>
    %445 = arith.mulf %444, %443 : vector<2x256xf32>
    %446 = arith.addf %435, %445 : vector<2x256xf32>
    %c34 = arith.constant 34 : index
    %447 = memref.load %arg1[%c34] : memref<98xf32, #tpu.memory_space<smem>>
    %448 = vector.broadcast %447 : f32 to vector<2x256xf32>
    %449 = arith.mulf %448, %380 : vector<2x256xf32>
    %c83 = arith.constant 83 : index
    %450 = memref.load %arg1[%c83] : memref<98xf32, #tpu.memory_space<smem>>
    %451 = vector.broadcast %450 : f32 to vector<2x256xf32>
    %452 = arith.mulf %451, %383 : vector<2x256xf32>
    %453 = arith.addf %449, %452 : vector<2x256xf32>
    %c253_i32_90 = arith.constant 253 : i32
    %454 = tpu.dynamic_rotate %453 by %c253_i32_90 dim 1 : vector<2x256xf32>, i32 -> vector<2x256xf32>
    %455 = vector.broadcast %62 : vector<1x256xf32> to vector<2x256xf32>
    %456 = arith.mulf %455, %454 : vector<2x256xf32>
    %457 = arith.addf %446, %456 : vector<2x256xf32>
    %c224_i32 = arith.constant 224 : i32
    %458 = tpu.dynamic_rotate %63 by %c224_i32 dim 1 : vector<2x256xf32>, i32 -> vector<2x256xf32>
    %459 = vector.broadcast %55 : vector<1x256xf32> to vector<2x256xf32>
    %460 = arith.mulf %459, %458 : vector<2x256xf32>
    %c224_i32_91 = arith.constant 224 : i32
    %461 = tpu.dynamic_rotate %64 by %c224_i32_91 dim 1 : vector<2x256xf32>, i32 -> vector<2x256xf32>
    %462 = vector.broadcast %55 : vector<1x256xf32> to vector<2x256xf32>
    %463 = arith.mulf %462, %461 : vector<2x256xf32>
    %c35 = arith.constant 35 : index
    %464 = memref.load %arg1[%c35] : memref<98xf32, #tpu.memory_space<smem>>
    %465 = vector.broadcast %464 : f32 to vector<2x256xf32>
    %466 = arith.mulf %465, %460 : vector<2x256xf32>
    %c84 = arith.constant 84 : index
    %467 = memref.load %arg1[%c84] : memref<98xf32, #tpu.memory_space<smem>>
    %468 = vector.broadcast %467 : f32 to vector<2x256xf32>
    %469 = arith.mulf %468, %463 : vector<2x256xf32>
    %470 = arith.addf %466, %469 : vector<2x256xf32>
    %c3_i32_92 = arith.constant 3 : i32
    %471 = tpu.dynamic_rotate %470 by %c3_i32_92 dim 1 : vector<2x256xf32>, i32 -> vector<2x256xf32>
    %472 = vector.broadcast %57 : vector<1x256xf32> to vector<2x256xf32>
    %473 = arith.mulf %472, %471 : vector<2x256xf32>
    %474 = arith.addf %457, %473 : vector<2x256xf32>
    %c36 = arith.constant 36 : index
    %475 = memref.load %arg1[%c36] : memref<98xf32, #tpu.memory_space<smem>>
    %476 = vector.broadcast %475 : f32 to vector<2x256xf32>
    %477 = arith.mulf %476, %460 : vector<2x256xf32>
    %c85 = arith.constant 85 : index
    %478 = memref.load %arg1[%c85] : memref<98xf32, #tpu.memory_space<smem>>
    %479 = vector.broadcast %478 : f32 to vector<2x256xf32>
    %480 = arith.mulf %479, %463 : vector<2x256xf32>
    %481 = arith.addf %477, %480 : vector<2x256xf32>
    %c2_i32_93 = arith.constant 2 : i32
    %482 = tpu.dynamic_rotate %481 by %c2_i32_93 dim 1 : vector<2x256xf32>, i32 -> vector<2x256xf32>
    %483 = vector.broadcast %58 : vector<1x256xf32> to vector<2x256xf32>
    %484 = arith.mulf %483, %482 : vector<2x256xf32>
    %485 = arith.addf %474, %484 : vector<2x256xf32>
    %c37 = arith.constant 37 : index
    %486 = memref.load %arg1[%c37] : memref<98xf32, #tpu.memory_space<smem>>
    %487 = vector.broadcast %486 : f32 to vector<2x256xf32>
    %488 = arith.mulf %487, %460 : vector<2x256xf32>
    %c86 = arith.constant 86 : index
    %489 = memref.load %arg1[%c86] : memref<98xf32, #tpu.memory_space<smem>>
    %490 = vector.broadcast %489 : f32 to vector<2x256xf32>
    %491 = arith.mulf %490, %463 : vector<2x256xf32>
    %492 = arith.addf %488, %491 : vector<2x256xf32>
    %c1_i32_94 = arith.constant 1 : i32
    %493 = tpu.dynamic_rotate %492 by %c1_i32_94 dim 1 : vector<2x256xf32>, i32 -> vector<2x256xf32>
    %494 = vector.broadcast %59 : vector<1x256xf32> to vector<2x256xf32>
    %495 = arith.mulf %494, %493 : vector<2x256xf32>
    %496 = arith.addf %485, %495 : vector<2x256xf32>
    %c38 = arith.constant 38 : index
    %497 = memref.load %arg1[%c38] : memref<98xf32, #tpu.memory_space<smem>>
    %498 = vector.broadcast %497 : f32 to vector<2x256xf32>
    %499 = arith.mulf %498, %460 : vector<2x256xf32>
    %c87 = arith.constant 87 : index
    %500 = memref.load %arg1[%c87] : memref<98xf32, #tpu.memory_space<smem>>
    %501 = vector.broadcast %500 : f32 to vector<2x256xf32>
    %502 = arith.mulf %501, %463 : vector<2x256xf32>
    %503 = arith.addf %499, %502 : vector<2x256xf32>
    %504 = arith.addf %496, %503 : vector<2x256xf32>
    %c39 = arith.constant 39 : index
    %505 = memref.load %arg1[%c39] : memref<98xf32, #tpu.memory_space<smem>>
    %506 = vector.broadcast %505 : f32 to vector<2x256xf32>
    %507 = arith.mulf %506, %460 : vector<2x256xf32>
    %c88 = arith.constant 88 : index
    %508 = memref.load %arg1[%c88] : memref<98xf32, #tpu.memory_space<smem>>
    %509 = vector.broadcast %508 : f32 to vector<2x256xf32>
    %510 = arith.mulf %509, %463 : vector<2x256xf32>
    %511 = arith.addf %507, %510 : vector<2x256xf32>
    %c255_i32_95 = arith.constant 255 : i32
    %512 = tpu.dynamic_rotate %511 by %c255_i32_95 dim 1 : vector<2x256xf32>, i32 -> vector<2x256xf32>
    %513 = vector.broadcast %60 : vector<1x256xf32> to vector<2x256xf32>
    %514 = arith.mulf %513, %512 : vector<2x256xf32>
    %515 = arith.addf %504, %514 : vector<2x256xf32>
    %c40 = arith.constant 40 : index
    %516 = memref.load %arg1[%c40] : memref<98xf32, #tpu.memory_space<smem>>
    %517 = vector.broadcast %516 : f32 to vector<2x256xf32>
    %518 = arith.mulf %517, %460 : vector<2x256xf32>
    %c89 = arith.constant 89 : index
    %519 = memref.load %arg1[%c89] : memref<98xf32, #tpu.memory_space<smem>>
    %520 = vector.broadcast %519 : f32 to vector<2x256xf32>
    %521 = arith.mulf %520, %463 : vector<2x256xf32>
    %522 = arith.addf %518, %521 : vector<2x256xf32>
    %c254_i32_96 = arith.constant 254 : i32
    %523 = tpu.dynamic_rotate %522 by %c254_i32_96 dim 1 : vector<2x256xf32>, i32 -> vector<2x256xf32>
    %524 = vector.broadcast %61 : vector<1x256xf32> to vector<2x256xf32>
    %525 = arith.mulf %524, %523 : vector<2x256xf32>
    %526 = arith.addf %515, %525 : vector<2x256xf32>
    %c41 = arith.constant 41 : index
    %527 = memref.load %arg1[%c41] : memref<98xf32, #tpu.memory_space<smem>>
    %528 = vector.broadcast %527 : f32 to vector<2x256xf32>
    %529 = arith.mulf %528, %460 : vector<2x256xf32>
    %c90 = arith.constant 90 : index
    %530 = memref.load %arg1[%c90] : memref<98xf32, #tpu.memory_space<smem>>
    %531 = vector.broadcast %530 : f32 to vector<2x256xf32>
    %532 = arith.mulf %531, %463 : vector<2x256xf32>
    %533 = arith.addf %529, %532 : vector<2x256xf32>
    %c253_i32_97 = arith.constant 253 : i32
    %534 = tpu.dynamic_rotate %533 by %c253_i32_97 dim 1 : vector<2x256xf32>, i32 -> vector<2x256xf32>
    %535 = vector.broadcast %62 : vector<1x256xf32> to vector<2x256xf32>
    %536 = arith.mulf %535, %534 : vector<2x256xf32>
    %537 = arith.addf %526, %536 : vector<2x256xf32>
    %c208_i32 = arith.constant 208 : i32
    %538 = tpu.dynamic_rotate %63 by %c208_i32 dim 1 : vector<2x256xf32>, i32 -> vector<2x256xf32>
    %539 = vector.broadcast %56 : vector<1x256xf32> to vector<2x256xf32>
    %540 = arith.mulf %539, %538 : vector<2x256xf32>
    %c208_i32_98 = arith.constant 208 : i32
    %541 = tpu.dynamic_rotate %64 by %c208_i32_98 dim 1 : vector<2x256xf32>, i32 -> vector<2x256xf32>
    %542 = vector.broadcast %56 : vector<1x256xf32> to vector<2x256xf32>
    %543 = arith.mulf %542, %541 : vector<2x256xf32>
    %c42 = arith.constant 42 : index
    %544 = memref.load %arg1[%c42] : memref<98xf32, #tpu.memory_space<smem>>
    %545 = vector.broadcast %544 : f32 to vector<2x256xf32>
    %546 = arith.mulf %545, %540 : vector<2x256xf32>
    %c91 = arith.constant 91 : index
    %547 = memref.load %arg1[%c91] : memref<98xf32, #tpu.memory_space<smem>>
    %548 = vector.broadcast %547 : f32 to vector<2x256xf32>
    %549 = arith.mulf %548, %543 : vector<2x256xf32>
    %550 = arith.addf %546, %549 : vector<2x256xf32>
    %c3_i32_99 = arith.constant 3 : i32
    %551 = tpu.dynamic_rotate %550 by %c3_i32_99 dim 1 : vector<2x256xf32>, i32 -> vector<2x256xf32>
    %552 = vector.broadcast %57 : vector<1x256xf32> to vector<2x256xf32>
    %553 = arith.mulf %552, %551 : vector<2x256xf32>
    %554 = arith.addf %537, %553 : vector<2x256xf32>
    %c43 = arith.constant 43 : index
    %555 = memref.load %arg1[%c43] : memref<98xf32, #tpu.memory_space<smem>>
    %556 = vector.broadcast %555 : f32 to vector<2x256xf32>
    %557 = arith.mulf %556, %540 : vector<2x256xf32>
    %c92 = arith.constant 92 : index
    %558 = memref.load %arg1[%c92] : memref<98xf32, #tpu.memory_space<smem>>
    %559 = vector.broadcast %558 : f32 to vector<2x256xf32>
    %560 = arith.mulf %559, %543 : vector<2x256xf32>
    %561 = arith.addf %557, %560 : vector<2x256xf32>
    %c2_i32_100 = arith.constant 2 : i32
    %562 = tpu.dynamic_rotate %561 by %c2_i32_100 dim 1 : vector<2x256xf32>, i32 -> vector<2x256xf32>
    %563 = vector.broadcast %58 : vector<1x256xf32> to vector<2x256xf32>
    %564 = arith.mulf %563, %562 : vector<2x256xf32>
    %565 = arith.addf %554, %564 : vector<2x256xf32>
    %c44 = arith.constant 44 : index
    %566 = memref.load %arg1[%c44] : memref<98xf32, #tpu.memory_space<smem>>
    %567 = vector.broadcast %566 : f32 to vector<2x256xf32>
    %568 = arith.mulf %567, %540 : vector<2x256xf32>
    %c93 = arith.constant 93 : index
    %569 = memref.load %arg1[%c93] : memref<98xf32, #tpu.memory_space<smem>>
    %570 = vector.broadcast %569 : f32 to vector<2x256xf32>
    %571 = arith.mulf %570, %543 : vector<2x256xf32>
    %572 = arith.addf %568, %571 : vector<2x256xf32>
    %c1_i32_101 = arith.constant 1 : i32
    %573 = tpu.dynamic_rotate %572 by %c1_i32_101 dim 1 : vector<2x256xf32>, i32 -> vector<2x256xf32>
    %574 = vector.broadcast %59 : vector<1x256xf32> to vector<2x256xf32>
    %575 = arith.mulf %574, %573 : vector<2x256xf32>
    %576 = arith.addf %565, %575 : vector<2x256xf32>
    %c45 = arith.constant 45 : index
    %577 = memref.load %arg1[%c45] : memref<98xf32, #tpu.memory_space<smem>>
    %578 = vector.broadcast %577 : f32 to vector<2x256xf32>
    %579 = arith.mulf %578, %540 : vector<2x256xf32>
    %c94 = arith.constant 94 : index
    %580 = memref.load %arg1[%c94] : memref<98xf32, #tpu.memory_space<smem>>
    %581 = vector.broadcast %580 : f32 to vector<2x256xf32>
    %582 = arith.mulf %581, %543 : vector<2x256xf32>
    %583 = arith.addf %579, %582 : vector<2x256xf32>
    %584 = arith.addf %576, %583 : vector<2x256xf32>
    %c46 = arith.constant 46 : index
    %585 = memref.load %arg1[%c46] : memref<98xf32, #tpu.memory_space<smem>>
    %586 = vector.broadcast %585 : f32 to vector<2x256xf32>
    %587 = arith.mulf %586, %540 : vector<2x256xf32>
    %c95 = arith.constant 95 : index
    %588 = memref.load %arg1[%c95] : memref<98xf32, #tpu.memory_space<smem>>
    %589 = vector.broadcast %588 : f32 to vector<2x256xf32>
    %590 = arith.mulf %589, %543 : vector<2x256xf32>
    %591 = arith.addf %587, %590 : vector<2x256xf32>
    %c255_i32_102 = arith.constant 255 : i32
    %592 = tpu.dynamic_rotate %591 by %c255_i32_102 dim 1 : vector<2x256xf32>, i32 -> vector<2x256xf32>
    %593 = vector.broadcast %60 : vector<1x256xf32> to vector<2x256xf32>
    %594 = arith.mulf %593, %592 : vector<2x256xf32>
    %595 = arith.addf %584, %594 : vector<2x256xf32>
    %c47 = arith.constant 47 : index
    %596 = memref.load %arg1[%c47] : memref<98xf32, #tpu.memory_space<smem>>
    %597 = vector.broadcast %596 : f32 to vector<2x256xf32>
    %598 = arith.mulf %597, %540 : vector<2x256xf32>
    %c96 = arith.constant 96 : index
    %599 = memref.load %arg1[%c96] : memref<98xf32, #tpu.memory_space<smem>>
    %600 = vector.broadcast %599 : f32 to vector<2x256xf32>
    %601 = arith.mulf %600, %543 : vector<2x256xf32>
    %602 = arith.addf %598, %601 : vector<2x256xf32>
    %c254_i32_103 = arith.constant 254 : i32
    %603 = tpu.dynamic_rotate %602 by %c254_i32_103 dim 1 : vector<2x256xf32>, i32 -> vector<2x256xf32>
    %604 = vector.broadcast %61 : vector<1x256xf32> to vector<2x256xf32>
    %605 = arith.mulf %604, %603 : vector<2x256xf32>
    %606 = arith.addf %595, %605 : vector<2x256xf32>
    %c48 = arith.constant 48 : index
    %607 = memref.load %arg1[%c48] : memref<98xf32, #tpu.memory_space<smem>>
    %608 = vector.broadcast %607 : f32 to vector<2x256xf32>
    %609 = arith.mulf %608, %540 : vector<2x256xf32>
    %c97 = arith.constant 97 : index
    %610 = memref.load %arg1[%c97] : memref<98xf32, #tpu.memory_space<smem>>
    %611 = vector.broadcast %610 : f32 to vector<2x256xf32>
    %612 = arith.mulf %611, %543 : vector<2x256xf32>
    %613 = arith.addf %609, %612 : vector<2x256xf32>
    %c253_i32_104 = arith.constant 253 : i32
    %614 = tpu.dynamic_rotate %613 by %c253_i32_104 dim 1 : vector<2x256xf32>, i32 -> vector<2x256xf32>
    %615 = vector.broadcast %62 : vector<1x256xf32> to vector<2x256xf32>
    %616 = arith.mulf %615, %614 : vector<2x256xf32>
    %617 = arith.addf %606, %616 : vector<2x256xf32>
    %618 = arith.negf %617 : vector<2x256xf32>
    %619 = math.exp %618 : vector<2x256xf32>
    %cst_105 = arith.constant 1.000000e+00 : f32
    %620 = vector.broadcast %cst_105 : f32 to vector<2x256xf32>
    %621 = arith.addf %620, %619 : vector<2x256xf32>
    %622 = arith.divf %620, %621 : vector<2x256xf32>
    %c0_106 = arith.constant 0 : index
    %c0_107 = arith.constant 0 : index
    %623 = vector.load %arg8[%c0_106, %c0_107] : memref<2x256xf32, #tpu.memory_space<vmem>>, vector<2x256xf32>
    tpu.vector_store %arg8[%c0_106, %c0_107], %622 {strides = array<i32>} : memref<2x256xf32, #tpu.memory_space<vmem>>, vector<2x256xf32>,
    %c0_108 = arith.constant 0 : index
    %c0_109 = arith.constant 0 : index
    %624 = vector.load %arg8[%c0_108, %c0_109] : memref<2x256xf32, #tpu.memory_space<vmem>>, vector<1x256xf32>
    %c0_110 = arith.constant 0 : index
    %c0_111 = arith.constant 0 : index
    %c0_112 = arith.constant 0 : index
    %625 = vector.load %arg5[%c0_110, %c0_111, %c0_112] : memref<2x4x256xf32, #tpu.memory_space<vmem>>, vector<1x4x256xf32>
    %626 = vector.shape_cast %625 : vector<1x4x256xf32> to vector<4x256xf32>
    %627 = vector.broadcast %624 : vector<1x256xf32> to vector<4x256xf32>
    %628 = arith.mulf %626, %627 : vector<4x256xf32>
    %c0_113 = arith.constant 0 : index
    %c0_114 = arith.constant 0 : index
    %c0_115 = arith.constant 0 : index
    %629 = vector.load %arg5[%c0_113, %c0_114, %c0_115] : memref<2x4x256xf32, #tpu.memory_space<vmem>>, vector<1x4x256xf32>
    %630 = vector.shape_cast %629 : vector<1x4x256xf32> to vector<4x256xf32>
    %631 = vector.shape_cast %628 : vector<4x256xf32> to vector<1x4x256xf32>
    tpu.vector_store %arg5[%c0_113, %c0_114, %c0_115], %631 {strides = array<i32>} : memref<2x4x256xf32, #tpu.memory_space<vmem>>, vector<1x4x256xf32>,
    %c1_116 = arith.constant 1 : index
    %c0_117 = arith.constant 0 : index
    %632 = vector.load %arg8[%c1_116, %c0_117] : memref<2x256xf32, #tpu.memory_space<vmem>>, vector<1x256xf32>
    %c1_118 = arith.constant 1 : index
    %c0_119 = arith.constant 0 : index
    %c0_120 = arith.constant 0 : index
    %633 = vector.load %arg5[%c1_118, %c0_119, %c0_120] : memref<2x4x256xf32, #tpu.memory_space<vmem>>, vector<1x4x256xf32>
    %634 = vector.shape_cast %633 : vector<1x4x256xf32> to vector<4x256xf32>
    %635 = vector.broadcast %632 : vector<1x256xf32> to vector<4x256xf32>
    %636 = arith.mulf %634, %635 : vector<4x256xf32>
    %c1_121 = arith.constant 1 : index
    %c0_122 = arith.constant 0 : index
    %c0_123 = arith.constant 0 : index
    %637 = vector.load %arg5[%c1_121, %c0_122, %c0_123] : memref<2x4x256xf32, #tpu.memory_space<vmem>>, vector<1x4x256xf32>
    %638 = vector.shape_cast %637 : vector<1x4x256xf32> to vector<4x256xf32>
    %639 = vector.shape_cast %636 : vector<4x256xf32> to vector<1x4x256xf32>
    tpu.vector_store %arg5[%c1_121, %c0_122, %c0_123], %639 {strides = array<i32>} : memref<2x4x256xf32, #tpu.memory_space<vmem>>, vector<1x4x256xf32>,
    return
  }
  func.func @transform_0(%arg0: i32, %arg1: memref<98xf32, #tpu.memory_space<smem>>) -> (i32, i32) {
    %c0_i32 = arith.constant 0 : i32
    %c0_i32_0 = arith.constant 0 : i32
    %c0_i32_1 = arith.constant 0 : i32
    return %c0_i32, %c0_i32_0 : i32, i32
  }
  func.func @transform_1(%arg0: i32, %arg1: memref<98xf32, #tpu.memory_space<smem>>) -> (i32, i32) {
    %c0_i32 = arith.constant 0 : i32
    %c0_i32_0 = arith.constant 0 : i32
    %c0_i32_1 = arith.constant 0 : i32
    return %c0_i32, %c0_i32_0 : i32, i32
  }
  func.func @transform_2(%arg0: i32, %arg1: memref<98xf32, #tpu.memory_space<smem>>) -> (i32, i32, i32) {
    %c0_i32 = arith.constant 0 : i32
    %c0_i32_0 = arith.constant 0 : i32
    %c0_i32_1 = arith.constant 0 : i32
    return %arg0, %c0_i32, %c0_i32_0 : i32, i32, i32
  }
  func.func @transform_3(%arg0: i32, %arg1: memref<98xf32, #tpu.memory_space<smem>>) -> (i32, i32, i32) {
    %c0_i32 = arith.constant 0 : i32
    %c0_i32_0 = arith.constant 0 : i32
    %c0_i32_1 = arith.constant 0 : i32
    return %arg0, %c0_i32, %c0_i32_0 : i32, i32, i32
  }
}

</mosaic_0001>

<llo_original>
// kernel: tpu_custom_call.1
$region0: #{tpu_custom_call.1}
  #allocation0 [shape = 'u32[]', space=smem, size = 0x4, offset = 0x4, fixed_abs, tag = 'smem constant byte address 0x4 - core index']
  #allocation1 [shape = 'u32[72,128]{1,0:T(1,128)}', space=vmem, size = 0x9000, scoped, tag = 'internal scratch']
  #allocation2 [shape = 'f32[2,256]{1,0:T(2,128)}', space=vmem, size = 0x800, scoped, tag = 'scratch operand']
  #allocation3 [shape = 'f32[2,256]{1,0:T(2,128)}', space=vmem, size = 0x800, scoped, tag = 'scratch operand']
  #allocation4 [shape = 'f32[2,256]{1,0:T(2,128)}', space=vmem, size = 0x800, scoped, tag = 'scratch operand']
  #allocation5 [shape = 's32[1]{0}', space=sflag, size = 0x4, scoped, tag = 'scoped memory for tpu_custom_call.1']
  #allocation6 [shape = 'u8[512]{0}', space=smem, size = 0x200, scoped, tag = 'prefetched SMEM operand 0']
  %s0 = inlined_call_operand.hbm [shape: f32[98], index: 0, kind: input, shape index: {}]
  %s1 = inlined_call_operand.hbm [shape: f32[4,4], index: 1, kind: input, shape index: {}]
  %s2 = inlined_call_operand.hbm [shape: f32[14,256], index: 2, kind: input, shape index: {}]
  %s3 = inlined_call_operand.hbm [shape: f32[2,4,256], index: 3, kind: input, shape index: {}]
  %s4 = inlined_call_operand.hbm [shape: f32[2,4,256], index: 4, kind: output, shape index: {}]
  %s5 = sld [smem:[#allocation0]]
  $region34: #{tpu_custom_call.1} parent=0
    _
  %s7 = ssub.s32 1, %s5
  %s8 = scalar_select 0, %s7, %s5
  %s10 = sshll.u32 %s0, 4
  %s11 = int_to_ptr.hbm [resolvable:$true] %s10
  %13 = dma.hbm_to_smem %s11, 16, [#allocation6], [#allocation5]
  %15 = dma.done [#allocation5], 16
  %16 = sfence
  $region1: #{tpu_custom_call.1} parent=0
    #allocation7 [shape = 'u8[2048]{0}', space=vmem, size = 0x800, scoped, tag = 'input window, operand 1, single buffered']
    #allocation8 [shape = 's32[1]{0}', space=sflag, size = 0x4, scoped, tag = 'scoped memory for tpu_custom_call.1']
    #allocation9 [shape = 's32[1]{0}', space=sflag, size = 0x4, scoped, tag = 'scoped memory for tpu_custom_call.1']
    #allocation10 [shape = 'u8[16384]{0}', space=vmem, size = 0x4000, scoped, tag = 'input window, operand 2, single buffered']
    #allocation11 [shape = 's32[1]{0}', space=sflag, size = 0x4, scoped, tag = 'scoped memory for tpu_custom_call.1']
    #allocation12 [shape = 'u8[8192]{0}', space=vmem, size = 0x2000, scoped, tag = 'input window, operand 3, single buffered']
    #allocation13 [shape = 'u8[8192]{0}', space=vmem, size = 0x2000, scoped, tag = 'output window, operand 0, single buffered']
    %17 = vsyncpa [#allocation8], 0
    %18 = vsyncpa [#allocation11], 0
    %19 = vsyncpa [#allocation9], 0
    // Predicated region
    $region2: #{tpu_custom_call.1} parent=1 // pred_check
      _
    $region3: #{tpu_custom_call.1} parent=1 // pred_check_branch
      %21 = sbr.rel (0) target = $region5
    $region4: #{tpu_custom_call.1} parent=1 // pred_region
      %23 = vsyncadd [#allocation8], 0
      %s25 = sshll.u32 %s1, 4
      %s26 = int_to_ptr.hbm [resolvable:$true] %s25
      %s27 = sshll.u32 [#allocation7], 4
      %s28 = int_to_ptr.vmem [resolvable:$true] %s27
      %30 = dma.hbm_to_vmem [thread:$0]  %s26, 64, %s28, [#allocation8]
    $region5: #{tpu_custom_call.1} parent=1 // pred_fallthru
      _
    // Predicated region
    $region6: #{tpu_custom_call.1} parent=1 // pred_check
      _
    $region7: #{tpu_custom_call.1} parent=1 // pred_check_branch
      %32 = sbr.rel (0) target = $region9
    $region8: #{tpu_custom_call.1} parent=1 // pred_region
      %34 = vsyncadd [#allocation11], 0
      %s35 = sshll.u32 %s2, 4
      %s36 = int_to_ptr.hbm [resolvable:$true] %s35
      %s37 = sshll.u32 [#allocation10], 4
      %s38 = int_to_ptr.vmem [resolvable:$true] %s37
      %43 = dma.hbm_to_vmem [thread:$0]  %s36, 512, %s38, [#allocation11], 256, 256, 16
    $region9: #{tpu_custom_call.1} parent=1 // pred_fallthru
      _
    // Predicated region
    $region10: #{tpu_custom_call.1} parent=1 // pred_check
      _
    $region11: #{tpu_custom_call.1} parent=1 // pred_check_branch
      %45 = sbr.rel (0) target = $region13
    $region12: #{tpu_custom_call.1} parent=1 // pred_region
      %47 = vsyncadd [#allocation11], 0
      %s48 = sshll.u32 %s3, 4
      %s49 = int_to_ptr.hbm [resolvable:$true] %s48
      %s50 = sshll.u32 [#allocation12], 4
      %s51 = int_to_ptr.vmem [resolvable:$true] %s50
      %56 = dma.hbm_to_vmem [thread:$0]  %s49, 256, %s51, [#allocation11], 128, 128, 8
    $region13: #{tpu_custom_call.1} parent=1 // pred_fallthru
      _
    // Predicated region
    $region14: #{tpu_custom_call.1} parent=1 // pred_check
      _
    $region15: #{tpu_custom_call.1} parent=1 // pred_check_branch
      %58 = sbr.rel (0) target = $region17
    $region16: #{tpu_custom_call.1} parent=1 // pred_region
      %60 = dma.done [#allocation8], 64
    $region17: #{tpu_custom_call.1} parent=1 // pred_fallthru
      _
    // Predicated region
    $region18: #{tpu_custom_call.1} parent=1 // pred_check
      _
    $region19: #{tpu_custom_call.1} parent=1 // pred_check_branch
      %62 = sbr.rel (0) target = $region21
    $region20: #{tpu_custom_call.1} parent=1 // pred_region
      %64 = dma.done [#allocation11], 512
    $region21: #{tpu_custom_call.1} parent=1 // pred_fallthru
      _
    // Predicated region
    $region22: #{tpu_custom_call.1} parent=1 // pred_check
      _
    $region23: #{tpu_custom_call.1} parent=1 // pred_check_branch
      %66 = sbr.rel (0) target = $region25
    $region24: #{tpu_custom_call.1} parent=1 // pred_region
      %68 = dma.done [#allocation11], 256
    $region25: #{tpu_custom_call.1} parent=1 // pred_fallthru
      _
    %v69 = vld [vmem:[#allocation7] sm:$0xf]
    %v70 = vld [vmem:[#allocation12] sm:$0xff]
    %72 = vst [vmem:[#allocation1] ss:$2 sm:$0xff] %v70
    %v73 = vld.sshfl [vmem:[#allocation1] sm:$0xff pattern:$0x75316420]
    %v74 = vld.sshfl [vmem:[#allocation1 + $0x8] sm:$0xff pattern:$0x75316420]
    %vm77 = vcmask 1043456
    %v78 = vsel %vm77, %v73, 0.0
    %v79 = vsel %vm77, %v74, 0.0
    %v80 = vadd.f32 %v78, %v79
    %81 = vadd.xlane.f32.xlu0 %v80
    %v82 = vpop.xlane.xlu0 %81
    %v83 = vrcp.pop 256.0
    %v84 = vmul.f32 256.0, %v83
    %v85 = vsub.f32 1.0, %v84
    %v86 = vmul.f32 %v83, %v85
    %v87 = vadd.f32 %v83, %v86
    %vm88 = vweird.f32 %v83
    %v89 = vsel %vm88, %v83, %v87
    %v90 = vmul.f32 %v82, %v89
    %vm91 = vcmask 31744
    %v93 = vsel %vm91, %v69, 0
    %v96 = vsel %vm77, %v90, 0
    %98 = vmatpush.msra.mxu0 0.0
    %99 = vmatpush.msra.mxu0 0.0
    %100 = vmatpush.msra.mxu0 0.0
    %101 = vmatpush.msra.mxu0 0.0
    %102 = vmatpush.msra.mxu0 0.0
    %103 = vmatpush.msra.mxu0 0.0
    %104 = vmatpush.msra.mxu0 0.0
    %105 = vmatpush.msra.mxu0 0.0
    %106 = vmatpush.msra.mxu0 0.0
    %107 = vmatpush.msra.mxu0 0.0
    %108 = vmatpush.msra.mxu0 0.0
    %109 = vmatpush.msra.mxu0 0.0
    %110 = vmatpush.msra.mxu0 0.0
    %111 = vmatpush.msra.mxu0 0.0
    %112 = vmatpush.msra.mxu0 0.0
    %v113 = vand.u32 %v96, 4294901760
    %114 = vmatpush.msra.mxu0 %v113
    %v115 = vand.u32 %v93, 4294901760
    %v116 = vsub.f32 %v93, %v115
    %v117 = vand.u32 %v116, 4294901760
    %v118 = vsub.f32 %v116, %v117
    %v119 = vand.u32 %v118, 4294901760
    %120 = vmatmul.f32.gmra.mxu0 %v119
    %v121 = vpop.f32.mrf.mxu0
    %v122 = vadd.f32 0.0, %v121
    %123 = vdwg.mxu0
    %124 = vmatpush.msra.mxu0 0.0
    %125 = vmatpush.msra.mxu0 0.0
    %126 = vmatpush.msra.mxu0 0.0
    %127 = vmatpush.msra.mxu0 0.0
    %128 = vmatpush.msra.mxu0 0.0
    %129 = vmatpush.msra.mxu0 0.0
    %130 = vmatpush.msra.mxu0 0.0
    %131 = vmatpush.msra.mxu0 0.0
    %132 = vmatpush.msra.mxu0 0.0
    %133 = vmatpush.msra.mxu0 0.0
    %134 = vmatpush.msra.mxu0 0.0
    %135 = vmatpush.msra.mxu0 0.0
    %136 = vmatpush.msra.mxu0 0.0
    %137 = vmatpush.msra.mxu0 0.0
    %138 = vmatpush.msra.mxu0 0.0
    %v139 = vand.u32 %v96, 4294901760
    %v140 = vsub.f32 %v96, %v139
    %v141 = vand.u32 %v140, 4294901760
    %v142 = vsub.f32 %v140, %v141
    %v143 = vand.u32 %v142, 4294901760
    %144 = vmatpush.msra.mxu0 %v143
    %v145 = vand.u32 %v93, 4294901760
    %146 = vmatmul.f32.gmra.mxu0 %v145
    %v147 = vpop.f32.mrf.mxu0
    %v148 = vadd.f32 %v122, %v147
    %149 = vdwg.mxu0
    %150 = vmatpush.msra.mxu0 0.0
    %151 = vmatpush.msra.mxu0 0.0
    %152 = vmatpush.msra.mxu0 0.0
    %153 = vmatpush.msra.mxu0 0.0
    %154 = vmatpush.msra.mxu0 0.0
    %155 = vmatpush.msra.mxu0 0.0
    %156 = vmatpush.msra.mxu0 0.0
    %157 = vmatpush.msra.mxu0 0.0
    %158 = vmatpush.msra.mxu0 0.0
    %159 = vmatpush.msra.mxu0 0.0
    %160 = vmatpush.msra.mxu0 0.0
    %161 = vmatpush.msra.mxu0 0.0
    %162 = vmatpush.msra.mxu0 0.0
    %163 = vmatpush.msra.mxu0 0.0
    %164 = vmatpush.msra.mxu0 0.0
    %v165 = vand.u32 %v96, 4294901760
    %v166 = vsub.f32 %v96, %v165
    %167 = vmatpush.msra.mxu0 %v166
    %v168 = vand.u32 %v93, 4294901760
    %v169 = vsub.f32 %v93, %v168
    %170 = vmatmul.f32.gmra.mxu0 %v169
    %v171 = vpop.f32.mrf.mxu0
    %v172 = vadd.f32 %v148, %v171
    %173 = vdwg.mxu0
    %174 = vmatpush.msra.mxu0 0.0
    %175 = vmatpush.msra.mxu0 0.0
    %176 = vmatpush.msra.mxu0 0.0
    %177 = vmatpush.msra.mxu0 0.0
    %178 = vmatpush.msra.mxu0 0.0
    %179 = vmatpush.msra.mxu0 0.0
    %180 = vmatpush.msra.mxu0 0.0
    %181 = vmatpush.msra.mxu0 0.0
    %182 = vmatpush.msra.mxu0 0.0
    %183 = vmatpush.msra.mxu0 0.0
    %184 = vmatpush.msra.mxu0 0.0
    %185 = vmatpush.msra.mxu0 0.0
    %186 = vmatpush.msra.mxu0 0.0
    %187 = vmatpush.msra.mxu0 0.0
    %188 = vmatpush.msra.mxu0 0.0
    %v189 = vand.u32 %v96, 4294901760
    %190 = vmatpush.msra.mxu0 %v189
    %v191 = vand.u32 %v93, 4294901760
    %v192 = vsub.f32 %v93, %v191
    %v193 = vand.u32 %v192, 4294901760
    %194 = vmatmul.f32.gmra.mxu0 %v193
    %v195 = vpop.f32.mrf.mxu0
    %v196 = vadd.f32 %v172, %v195
    %197 = vdwg.mxu0
    %198 = vmatpush.msra.mxu0 0.0
    %199 = vmatpush.msra.mxu0 0.0
    %200 = vmatpush.msra.mxu0 0.0
    %201 = vmatpush.msra.mxu0 0.0
    %202 = vmatpush.msra.mxu0 0.0
    %203 = vmatpush.msra.mxu0 0.0
    %204 = vmatpush.msra.mxu0 0.0
    %205 = vmatpush.msra.mxu0 0.0
    %206 = vmatpush.msra.mxu0 0.0
    %207 = vmatpush.msra.mxu0 0.0
    %208 = vmatpush.msra.mxu0 0.0
    %209 = vmatpush.msra.mxu0 0.0
    %210 = vmatpush.msra.mxu0 0.0
    %211 = vmatpush.msra.mxu0 0.0
    %212 = vmatpush.msra.mxu0 0.0
    %v213 = vand.u32 %v96, 4294901760
    %v214 = vsub.f32 %v96, %v213
    %v215 = vand.u32 %v214, 4294901760
    %216 = vmatpush.msra.mxu0 %v215
    %v217 = vand.u32 %v93, 4294901760
    %218 = vmatmul.f32.gmra.mxu0 %v217
    %v219 = vpop.f32.mrf.mxu0
    %v220 = vadd.f32 %v196, %v219
    %221 = vdwg.mxu0
    %222 = vmatpush.msra.mxu0 0.0
    %223 = vmatpush.msra.mxu0 0.0
    %224 = vmatpush.msra.mxu0 0.0
    %225 = vmatpush.msra.mxu0 0.0
    %226 = vmatpush.msra.mxu0 0.0
    %227 = vmatpush.msra.mxu0 0.0
    %228 = vmatpush.msra.mxu0 0.0
    %229 = vmatpush.msra.mxu0 0.0
    %230 = vmatpush.msra.mxu0 0.0
    %231 = vmatpush.msra.mxu0 0.0
    %232 = vmatpush.msra.mxu0 0.0
    %233 = vmatpush.msra.mxu0 0.0
    %234 = vmatpush.msra.mxu0 0.0
    %235 = vmatpush.msra.mxu0 0.0
    %236 = vmatpush.msra.mxu0 0.0
    %v237 = vand.u32 %v96, 4294901760
    %238 = vmatpush.msra.mxu0 %v237
    %v239 = vand.u32 %v93, 4294901760
    %240 = vmatmul.f32.gmra.mxu0 %v239
    %v241 = vpop.f32.mrf.mxu0
    %v242 = vadd.f32 %v220, %v241
    %243 = vdwg.mxu0
    %v244 = vxor.u32 %v242, 2147483648
    %v245 = vmul.f32 %v244, 1.442695
    %v246 = vpow.pop %v245
    %v247 = vadd.f32 %v246, 1.0
    %v248 = vrcp.pop %v247
    %v249 = vmul.f32 %v247, %v248
    %v250 = vsub.f32 1.0, %v249
    %v251 = vmul.f32 %v248, %v250
    %v252 = vadd.f32 %v248, %v251
    %vm253 = vweird.f32 %v247
    %vm254 = vweird.f32 %v248
    %vm255 = vmor %vm253, %vm254
    %v256 = vsel %vm255, %v248, %v252
    %v257 = vand.u32 2147483647, %v247
    %vm258 = vcmp.eq.f32.partialorder %v257, 8.507059e+37
    %v259 = vand.u32 %v247, 2147483648
    %v260 = vor.u32 1.1754944e-38, %v259
    %v261 = vsel %vm258, %v260, %v256
    %v262 = vmul.f32 1.0, %v261
    %264 = vset.pattern.permute.xlu0 0
    %265 = vperm.xlu0 %264, %v262
    %v266 = vpop.permute.xlu0 %265
    %v268 = vunpack.c.l.s4 839922192
    %v269 = vunpack.c.0.s8 %v268
    %v270 = vperm.slane %v266, %v269
    %v272 = vmul.f32 %v70, %v270
    %274 = vst [vmem:[#allocation1] ss:$2 sm:$0xff] %v272
    %v275 = vld.sshfl [vmem:[#allocation1] sm:$0xff pattern:$0x75316420]
    %v276 = vld.sshfl [vmem:[#allocation1 + $0x8] sm:$0xff pattern:$0x75316420]
    %v279 = vsel %vm77, %v275, 0.0
    %v280 = vrot.slane %v279, 4
    %v281 = vadd.f32 %v279, %v280
    %v282 = vrot.slane %v281, 2
    %v283 = vadd.f32 %v281, %v282
    %v284 = vrot.slane %v283, 1
    %v285 = vadd.f32 %v283, %v284
    %v286 = vsel %vm77, %v276, 0.0
    %v287 = vrot.slane %v286, 4
    %v288 = vadd.f32 %v286, %v287
    %v289 = vrot.slane %v288, 2
    %v290 = vadd.f32 %v288, %v289
    %v291 = vrot.slane %v290, 1
    %v292 = vadd.f32 %v290, %v291
    %v293 = vrcp.pop 4.0
    %v294 = vmul.f32 4.0, %v293
    %v295 = vsub.f32 1.0, %v294
    %v296 = vmul.f32 %v293, %v295
    %v297 = vadd.f32 %v293, %v296
    %vm298 = vweird.f32 %v293
    %v299 = vsel %vm298, %v293, %v297
    %v300 = vmul.f32 %v285, %v299
    %v301 = vmul.f32 %v292, %v299
    %v304 = vrot.slane %v301, 7
    %vm305 = vcmask 1040384
    %v306 = vsel %vm305, %v300, %v304
    %v308 = vlaneseq
    %vm309 = vcmp.ge.s32.totalorder %v308, 0
    %vm310 = vcmp.lt.s32.totalorder %v308, 256
    %vm311 = vmand %vm309, %vm310
    %312 = vst.msk [vmem:[#allocation2] ss:$2 sm:$0x3] %vm311, %v306
    %313 = vst [vmem:[#allocation1] ss:$2 sm:$0xff] %v272
    %v314 = vld.sshfl [vmem:[#allocation1] sm:$0xff pattern:$0x75316420]
    %v315 = vld.sshfl [vmem:[#allocation1 + $0x8] sm:$0xff pattern:$0x75316420]
    %v318 = vsel %vm77, %v314, -inf
    %v319 = vrot.slane %v318, 4
    %v320 = vmax.f32 %v318, %v319
    %v321 = vrot.slane %v320, 2
    %v322 = vmax.f32 %v320, %v321
    %v323 = vrot.slane %v322, 1
    %v324 = vmax.f32 %v322, %v323
    %v325 = vsel %vm77, %v315, -inf
    %v326 = vrot.slane %v325, 4
    %v327 = vmax.f32 %v325, %v326
    %v328 = vrot.slane %v327, 2
    %v329 = vmax.f32 %v327, %v328
    %v330 = vrot.slane %v329, 1
    %v331 = vmax.f32 %v329, %v330
    %v334 = vrot.slane %v331, 7
    %v335 = vsel %vm305, %v324, %v334
    %337 = vst.msk [vmem:[#allocation3] ss:$2 sm:$0x3] %vm311, %v335
    %338 = vst [vmem:[#allocation13] sm:$0xff] %v272
    %s339 = scalar_lea.vmem [#allocation12], 8
    %v340 = vld [vmem:[%s339] sm:$0xff]
    %342 = vst [vmem:[#allocation1] ss:$2 sm:$0xff] %v340
    %v343 = vld.sshfl [vmem:[#allocation1] sm:$0xff pattern:$0x75316420]
    %v344 = vld.sshfl [vmem:[#allocation1 + $0x8] sm:$0xff pattern:$0x75316420]
    %v347 = vsel %vm77, %v343, 0.0
    %v348 = vsel %vm77, %v344, 0.0
    %v349 = vadd.f32 %v347, %v348
    %350 = vadd.xlane.f32.xlu0 %v349
    %v351 = vpop.xlane.xlu0 %350
    %v352 = vmul.f32 %v351, %v89
    %v354 = vsel %vm77, %v352, 0
    %356 = vmatpush.msra.mxu0 0.0
    %357 = vmatpush.msra.mxu0 0.0
    %358 = vmatpush.msra.mxu0 0.0
    %359 = vmatpush.msra.mxu0 0.0
    %360 = vmatpush.msra.mxu0 0.0
    %361 = vmatpush.msra.mxu0 0.0
    %362 = vmatpush.msra.mxu0 0.0
    %363 = vmatpush.msra.mxu0 0.0
    %364 = vmatpush.msra.mxu0 0.0
    %365 = vmatpush.msra.mxu0 0.0
    %366 = vmatpush.msra.mxu0 0.0
    %367 = vmatpush.msra.mxu0 0.0
    %368 = vmatpush.msra.mxu0 0.0
    %369 = vmatpush.msra.mxu0 0.0
    %370 = vmatpush.msra.mxu0 0.0
    %v371 = vand.u32 %v354, 4294901760
    %372 = vmatpush.msra.mxu0 %v371
    %v373 = vand.u32 %v93, 4294901760
    %v374 = vsub.f32 %v93, %v373
    %v375 = vand.u32 %v374, 4294901760
    %v376 = vsub.f32 %v374, %v375
    %v377 = vand.u32 %v376, 4294901760
    %378 = vmatmul.f32.gmra.mxu0 %v377
    %v379 = vpop.f32.mrf.mxu0
    %v380 = vadd.f32 0.0, %v379
    %381 = vdwg.mxu0
    %382 = vmatpush.msra.mxu0 0.0
    %383 = vmatpush.msra.mxu0 0.0
    %384 = vmatpush.msra.mxu0 0.0
    %385 = vmatpush.msra.mxu0 0.0
    %386 = vmatpush.msra.mxu0 0.0
    %387 = vmatpush.msra.mxu0 0.0
    %388 = vmatpush.msra.mxu0 0.0
    %389 = vmatpush.msra.mxu0 0.0
    %390 = vmatpush.msra.mxu0 0.0
    %391 = vmatpush.msra.mxu0 0.0
    %392 = vmatpush.msra.mxu0 0.0
    %393 = vmatpush.msra.mxu0 0.0
    %394 = vmatpush.msra.mxu0 0.0
    %395 = vmatpush.msra.mxu0 0.0
    %396 = vmatpush.msra.mxu0 0.0
    %v397 = vand.u32 %v354, 4294901760
    %v398 = vsub.f32 %v354, %v397
    %v399 = vand.u32 %v398, 4294901760
    %v400 = vsub.f32 %v398, %v399
    %v401 = vand.u32 %v400, 4294901760
    %402 = vmatpush.msra.mxu0 %v401
    %v403 = vand.u32 %v93, 4294901760
    %404 = vmatmul.f32.gmra.mxu0 %v403
    %v405 = vpop.f32.mrf.mxu0
    %v406 = vadd.f32 %v380, %v405
    %407 = vdwg.mxu0
    %408 = vmatpush.msra.mxu0 0.0
    %409 = vmatpush.msra.mxu0 0.0
    %410 = vmatpush.msra.mxu0 0.0
    %411 = vmatpush.msra.mxu0 0.0
    %412 = vmatpush.msra.mxu0 0.0
    %413 = vmatpush.msra.mxu0 0.0
    %414 = vmatpush.msra.mxu0 0.0
    %415 = vmatpush.msra.mxu0 0.0
    %416 = vmatpush.msra.mxu0 0.0
    %417 = vmatpush.msra.mxu0 0.0
    %418 = vmatpush.msra.mxu0 0.0
    %419 = vmatpush.msra.mxu0 0.0
    %420 = vmatpush.msra.mxu0 0.0
    %421 = vmatpush.msra.mxu0 0.0
    %422 = vmatpush.msra.mxu0 0.0
    %v423 = vand.u32 %v354, 4294901760
    %v424 = vsub.f32 %v354, %v423
    %425 = vmatpush.msra.mxu0 %v424
    %v426 = vand.u32 %v93, 4294901760
    %v427 = vsub.f32 %v93, %v426
    %428 = vmatmul.f32.gmra.mxu0 %v427
    %v429 = vpop.f32.mrf.mxu0
    %v430 = vadd.f32 %v406, %v429
    %431 = vdwg.mxu0
    %432 = vmatpush.msra.mxu0 0.0
    %433 = vmatpush.msra.mxu0 0.0
    %434 = vmatpush.msra.mxu0 0.0
    %435 = vmatpush.msra.mxu0 0.0
    %436 = vmatpush.msra.mxu0 0.0
    %437 = vmatpush.msra.mxu0 0.0
    %438 = vmatpush.msra.mxu0 0.0
    %439 = vmatpush.msra.mxu0 0.0
    %440 = vmatpush.msra.mxu0 0.0
    %441 = vmatpush.msra.mxu0 0.0
    %442 = vmatpush.msra.mxu0 0.0
    %443 = vmatpush.msra.mxu0 0.0
    %444 = vmatpush.msra.mxu0 0.0
    %445 = vmatpush.msra.mxu0 0.0
    %446 = vmatpush.msra.mxu0 0.0
    %v447 = vand.u32 %v354, 4294901760
    %448 = vmatpush.msra.mxu0 %v447
    %v449 = vand.u32 %v93, 4294901760
    %v450 = vsub.f32 %v93, %v449
    %v451 = vand.u32 %v450, 4294901760
    %452 = vmatmul.f32.gmra.mxu0 %v451
    %v453 = vpop.f32.mrf.mxu0
    %v454 = vadd.f32 %v430, %v453
    %455 = vdwg.mxu0
    %456 = vmatpush.msra.mxu0 0.0
    %457 = vmatpush.msra.mxu0 0.0
    %458 = vmatpush.msra.mxu0 0.0
    %459 = vmatpush.msra.mxu0 0.0
    %460 = vmatpush.msra.mxu0 0.0
    %461 = vmatpush.msra.mxu0 0.0
    %462 = vmatpush.msra.mxu0 0.0
    %463 = vmatpush.msra.mxu0 0.0
    %464 = vmatpush.msra.mxu0 0.0
    %465 = vmatpush.msra.mxu0 0.0
    %466 = vmatpush.msra.mxu0 0.0
    %467 = vmatpush.msra.mxu0 0.0
    %468 = vmatpush.msra.mxu0 0.0
    %469 = vmatpush.msra.mxu0 0.0
    %470 = vmatpush.msra.mxu0 0.0
    %v471 = vand.u32 %v354, 4294901760
    %v472 = vsub.f32 %v354, %v471
    %v473 = vand.u32 %v472, 4294901760
    %474 = vmatpush.msra.mxu0 %v473
    %v475 = vand.u32 %v93, 4294901760
    %476 = vmatmul.f32.gmra.mxu0 %v475
    %v477 = vpop.f32.mrf.mxu0
    %v478 = vadd.f32 %v454, %v477
    %479 = vdwg.mxu0
    %480 = vmatpush.msra.mxu0 0.0
    %481 = vmatpush.msra.mxu0 0.0
    %482 = vmatpush.msra.mxu0 0.0
    %483 = vmatpush.msra.mxu0 0.0
    %484 = vmatpush.msra.mxu0 0.0
    %485 = vmatpush.msra.mxu0 0.0
    %486 = vmatpush.msra.mxu0 0.0
    %487 = vmatpush.msra.mxu0 0.0
    %488 = vmatpush.msra.mxu0 0.0
    %489 = vmatpush.msra.mxu0 0.0
    %490 = vmatpush.msra.mxu0 0.0
    %491 = vmatpush.msra.mxu0 0.0
    %492 = vmatpush.msra.mxu0 0.0
    %493 = vmatpush.msra.mxu0 0.0
    %494 = vmatpush.msra.mxu0 0.0
    %v495 = vand.u32 %v354, 4294901760
    %496 = vmatpush.msra.mxu0 %v495
    %v497 = vand.u32 %v93, 4294901760
    %498 = vmatmul.f32.gmra.mxu0 %v497
    %v499 = vpop.f32.mrf.mxu0
    %v500 = vadd.f32 %v478, %v499
    %501 = vdwg.mxu0
    %v502 = vxor.u32 %v500, 2147483648
    %v503 = vmul.f32 %v502, 1.442695
    %v504 = vpow.pop %v503
    %v505 = vadd.f32 %v504, 1.0
    %v506 = vrcp.pop %v505
    %v507 = vmul.f32 %v505, %v506
    %v508 = vsub.f32 1.0, %v507
    %v509 = vmul.f32 %v506, %v508
    %v510 = vadd.f32 %v506, %v509
    %vm511 = vweird.f32 %v505
    %vm512 = vweird.f32 %v506
    %vm513 = vmor %vm511, %vm512
    %v514 = vsel %vm513, %v506, %v510
    %v515 = vand.u32 2147483647, %v505
    %vm516 = vcmp.eq.f32.partialorder %v515, 8.507059e+37
    %v517 = vand.u32 %v505, 2147483648
    %v518 = vor.u32 1.1754944e-38, %v517
    %v519 = vsel %vm516, %v518, %v514
    %v520 = vmul.f32 1.0, %v519
    %522 = vset.pattern.permute.xlu0 0
    %523 = vperm.xlu0 %522, %v520
    %v524 = vpop.permute.xlu0 %523
    %v526 = vunpack.c.l.s4 839922192
    %v527 = vunpack.c.0.s8 %v526
    %v528 = vperm.slane %v524, %v527
    %v530 = vmul.f32 %v340, %v528
    %532 = vst [vmem:[#allocation1] ss:$2 sm:$0xff] %v530
    %v533 = vld.sshfl [vmem:[#allocation1] sm:$0xff pattern:$0x75316420]
    %v534 = vld.sshfl [vmem:[#allocation1 + $0x8] sm:$0xff pattern:$0x75316420]
    %v537 = vsel %vm77, %v533, 0.0
    %v538 = vrot.slane %v537, 4
    %v539 = vadd.f32 %v537, %v538
    %v540 = vrot.slane %v539, 2
    %v541 = vadd.f32 %v539, %v540
    %v542 = vrot.slane %v541, 1
    %v543 = vadd.f32 %v541, %v542
    %v544 = vsel %vm77, %v534, 0.0
    %v545 = vrot.slane %v544, 4
    %v546 = vadd.f32 %v544, %v545
    %v547 = vrot.slane %v546, 2
    %v548 = vadd.f32 %v546, %v547
    %v549 = vrot.slane %v548, 1
    %v550 = vadd.f32 %v548, %v549
    %v551 = vmul.f32 %v543, %v299
    %v552 = vmul.f32 %v550, %v299
    %v555 = vrot.slane %v552, 7
    %v556 = vsel %vm305, %v551, %v555
    %s558 = scalar_lea.vmem [#allocation2], 1
    %559 = vst.msk [vmem:[%s558] ss:$2 sm:$0x3] %vm311, %v556
    %560 = vst [vmem:[#allocation1] ss:$2 sm:$0xff] %v530
    %v561 = vld.sshfl [vmem:[#allocation1] sm:$0xff pattern:$0x75316420]
    %v562 = vld.sshfl [vmem:[#allocation1 + $0x8] sm:$0xff pattern:$0x75316420]
    %v565 = vsel %vm77, %v561, -inf
    %v566 = vrot.slane %v565, 4
    %v567 = vmax.f32 %v565, %v566
    %v568 = vrot.slane %v567, 2
    %v569 = vmax.f32 %v567, %v568
    %v570 = vrot.slane %v569, 1
    %v571 = vmax.f32 %v569, %v570
    %v572 = vsel %vm77, %v562, -inf
    %v573 = vrot.slane %v572, 4
    %v574 = vmax.f32 %v572, %v573
    %v575 = vrot.slane %v574, 2
    %v576 = vmax.f32 %v574, %v575
    %v577 = vrot.slane %v576, 1
    %v578 = vmax.f32 %v576, %v577
    %v581 = vrot.slane %v578, 7
    %v582 = vsel %vm305, %v571, %v581
    %s584 = scalar_lea.vmem [#allocation3], 1
    %585 = vst.msk [vmem:[%s584] ss:$2 sm:$0x3] %vm311, %v582
    %s586 = scalar_lea.vmem [#allocation13], 8
    %587 = vst [vmem:[%s586] sm:$0xff] %v530
    %v588 = vld [vmem:[#allocation10] ss:$8 sm:$0x3]
    %s589 = scalar_lea.vmem [#allocation10], 1
    %v590 = vld [vmem:[%s589] ss:$8 sm:$0x3]
    %s591 = scalar_lea.vmem [#allocation10], 2
    %v592 = vld [vmem:[%s591] ss:$8 sm:$0x3]
    %s593 = scalar_lea.vmem [#allocation10], 4
    %v594 = vld [vmem:[%s593] ss:$8 sm:$0x3]
    %s595 = scalar_lea.vmem [#allocation10], 5
    %v596 = vld [vmem:[%s595] ss:$8 sm:$0x3]
    %s597 = scalar_lea.vmem [#allocation10], 6
    %v598 = vld [vmem:[%s597] ss:$8 sm:$0x3]
    %s599 = scalar_lea.vmem [#allocation10], 7
    %v600 = vld [vmem:[%s599] ss:$8 sm:$0x3]
    %s601 = scalar_lea.vmem [#allocation10], 16
    %v602 = vld [vmem:[%s601] ss:$8 sm:$0x3]
    %s603 = scalar_lea.vmem [#allocation10], 17
    %v604 = vld [vmem:[%s603] ss:$8 sm:$0x3]
    %s605 = scalar_lea.vmem [#allocation10], 19
    %v606 = vld [vmem:[%s605] ss:$8 sm:$0x3]
    %s607 = scalar_lea.vmem [#allocation10], 20
    %v608 = vld [vmem:[%s607] ss:$8 sm:$0x3]
    %s609 = scalar_lea.vmem [#allocation10], 21
    %v610 = vld [vmem:[%s609] ss:$8 sm:$0x3]
    %v611 = vld [vmem:[#allocation2] sm:$0xf]
    %v612 = vld [vmem:[#allocation3] sm:$0xf]
    %614 = vst [vmem:[#allocation1] ss:$4 sm:$0xff] %v611
    %v615 = vld.sshfl [vmem:[#allocation1] sm:$0xff pattern:$0x73625140]
    %v616 = vld.sshfl [vmem:[#allocation1 + $0x8] sm:$0xff pattern:$0x73625140]
    %619 = vrot.lane.b32.xlu0 %v615, 48
    %v620 = vpop.permute.xlu0 %619
    %621 = vrot.lane.b32.xlu0 %v616, 48
    %v622 = vpop.permute.xlu0 %621
    %v623 = vlaneseq
    %v624 = vand.u32 %v623, 127
    %vm625 = vcmp.lt.s32.totalorder %v624, 48
    %v626 = vsel %vm625, %v620, %v622
    %v627 = vsel %vm625, %v622, %v620
    %v629 = vperm.slane %v588, 0
    %v630 = vperm.slane %v588, 1
    %v633 = vmul.f32 %v629, %v627
    %v634 = vmul.f32 %v630, %v626
    %636 = vst [vmem:[#allocation1] ss:$4 sm:$0xff] %v612
    %v637 = vld.sshfl [vmem:[#allocation1] sm:$0xff pattern:$0x73625140]
    %v638 = vld.sshfl [vmem:[#allocation1 + $0x8] sm:$0xff pattern:$0x73625140]
    %641 = vrot.lane.b32.xlu0 %v637, 48
    %v642 = vpop.permute.xlu0 %641
    %643 = vrot.lane.b32.xlu0 %v638, 48
    %v644 = vpop.permute.xlu0 %643
    %v645 = vsel %vm625, %v642, %v644
    %v646 = vsel %vm625, %v644, %v642
    %v647 = vmul.f32 %v629, %v646
    %v648 = vmul.f32 %v630, %v645
    %s649 = sld [smem:[#allocation6]]
    %v650 = vstv %s649
    %v651 = vmul.f32 %v650, %v633
    %v652 = vmul.f32 %v650, %v634
    %s653 = sld [smem:[#allocation6 + $0x31]]
    %v654 = vstv %s653
    %v655 = vmul.f32 %v654, %v647
    %v656 = vmul.f32 %v654, %v648
    %v657 = vadd.f32 %v651, %v655
    %v658 = vadd.f32 %v652, %v656
    %659 = vrot.lane.b32.xlu0 %v657, 3
    %v660 = vpop.permute.xlu0 %659
    %661 = vrot.lane.b32.xlu0 %v658, 3
    %v662 = vpop.permute.xlu0 %661
    %vm663 = vcmp.lt.s32.totalorder %v624, 3
    %v664 = vsel %vm663, %v660, %v662
    %v665 = vsel %vm663, %v662, %v660
    %v667 = vperm.slane %v600, 0
    %v668 = vperm.slane %v600, 1
    %v671 = vmul.f32 %v667, %v665
    %v672 = vmul.f32 %v668, %v664
    %s673 = sld [smem:[#allocation6 + $0x1]]
    %v674 = vstv %s673
    %v675 = vmul.f32 %v674, %v633
    %v676 = vmul.f32 %v674, %v634
    %s677 = sld [smem:[#allocation6 + $0x32]]
    %v678 = vstv %s677
    %v679 = vmul.f32 %v678, %v647
    %v680 = vmul.f32 %v678, %v648
    %v681 = vadd.f32 %v675, %v679
    %v682 = vadd.f32 %v676, %v680
    %683 = vrot.lane.b32.xlu0 %v681, 2
    %v684 = vpop.permute.xlu0 %683
    %685 = vrot.lane.b32.xlu0 %v682, 2
    %v686 = vpop.permute.xlu0 %685
    %vm687 = vcmp.lt.s32.totalorder %v624, 2
    %v688 = vsel %vm687, %v684, %v686
    %v689 = vsel %vm687, %v686, %v684
    %v691 = vperm.slane %v602, 0
    %v692 = vperm.slane %v602, 1
    %v695 = vmul.f32 %v691, %v689
    %v696 = vmul.f32 %v692, %v688
    %v697 = vadd.f32 %v671, %v695
    %v698 = vadd.f32 %v672, %v696
    %s699 = sld [smem:[#allocation6 + $0x2]]
    %v700 = vstv %s699
    %v701 = vmul.f32 %v700, %v633
    %v702 = vmul.f32 %v700, %v634
    %s703 = sld [smem:[#allocation6 + $0x33]]
    %v704 = vstv %s703
    %v705 = vmul.f32 %v704, %v647
    %v706 = vmul.f32 %v704, %v648
    %v707 = vadd.f32 %v701, %v705
    %v708 = vadd.f32 %v702, %v706
    %709 = vrot.lane.b32.xlu0 %v707, 1
    %v710 = vpop.permute.xlu0 %709
    %711 = vrot.lane.b32.xlu0 %v708, 1
    %v712 = vpop.permute.xlu0 %711
    %vm713 = vcmp.lt.s32.totalorder %v624, 1
    %v714 = vsel %vm713, %v710, %v712
    %v715 = vsel %vm713, %v712, %v710
    %v717 = vperm.slane %v604, 0
    %v718 = vperm.slane %v604, 1
    %v721 = vmul.f32 %v717, %v715
    %v722 = vmul.f32 %v718, %v714
    %v723 = vadd.f32 %v697, %v721
    %v724 = vadd.f32 %v698, %v722
    %s725 = sld [smem:[#allocation6 + $0x3]]
    %v726 = vstv %s725
    %v727 = vmul.f32 %v726, %v633
    %v728 = vmul.f32 %v726, %v634
    %s729 = sld [smem:[#allocation6 + $0x34]]
    %v730 = vstv %s729
    %v731 = vmul.f32 %v730, %v647
    %v732 = vmul.f32 %v730, %v648
    %v733 = vadd.f32 %v727, %v731
    %v734 = vadd.f32 %v728, %v732
    %v735 = vadd.f32 %v723, %v733
    %v736 = vadd.f32 %v724, %v734
    %s737 = sld [smem:[#allocation6 + $0x4]]
    %v738 = vstv %s737
    %v739 = vmul.f32 %v738, %v633
    %v740 = vmul.f32 %v738, %v634
    %s741 = sld [smem:[#allocation6 + $0x35]]
    %v742 = vstv %s741
    %v743 = vmul.f32 %v742, %v647
    %v744 = vmul.f32 %v742, %v648
    %v745 = vadd.f32 %v739, %v743
    %v746 = vadd.f32 %v740, %v744
    %747 = vrot.lane.b32.xlu0 %v745, 127
    %v748 = vpop.permute.xlu0 %747
    %749 = vrot.lane.b32.xlu0 %v746, 127
    %v750 = vpop.permute.xlu0 %749
    %vm751 = vcmp.lt.s32.totalorder %v624, 127
    %v752 = vsel %vm751, %v748, %v750
    %v753 = vsel %vm751, %v750, %v748
    %v755 = vperm.slane %v606, 0
    %v756 = vperm.slane %v606, 1
    %v759 = vmul.f32 %v755, %v752
    %v760 = vmul.f32 %v756, %v753
    %v761 = vadd.f32 %v735, %v759
    %v762 = vadd.f32 %v736, %v760
    %s763 = sld [smem:[#allocation6 + $0x5]]
    %v764 = vstv %s763
    %v765 = vmul.f32 %v764, %v633
    %v766 = vmul.f32 %v764, %v634
    %s767 = sld [smem:[#allocation6 + $0x36]]
    %v768 = vstv %s767
    %v769 = vmul.f32 %v768, %v647
    %v770 = vmul.f32 %v768, %v648
    %v771 = vadd.f32 %v765, %v769
    %v772 = vadd.f32 %v766, %v770
    %773 = vrot.lane.b32.xlu0 %v771, 126
    %v774 = vpop.permute.xlu0 %773
    %775 = vrot.lane.b32.xlu0 %v772, 126
    %v776 = vpop.permute.xlu0 %775
    %vm777 = vcmp.lt.s32.totalorder %v624, 126
    %v778 = vsel %vm777, %v774, %v776
    %v779 = vsel %vm777, %v776, %v774
    %v781 = vperm.slane %v608, 0
    %v782 = vperm.slane %v608, 1
    %v785 = vmul.f32 %v781, %v778
    %v786 = vmul.f32 %v782, %v779
    %v787 = vadd.f32 %v761, %v785
    %v788 = vadd.f32 %v762, %v786
    %s789 = sld [smem:[#allocation6 + $0x6]]
    %v790 = vstv %s789
    %v791 = vmul.f32 %v790, %v633
    %v792 = vmul.f32 %v790, %v634
    %s793 = sld [smem:[#allocation6 + $0x37]]
    %v794 = vstv %s793
    %v795 = vmul.f32 %v794, %v647
    %v796 = vmul.f32 %v794, %v648
    %v797 = vadd.f32 %v791, %v795
    %v798 = vadd.f32 %v792, %v796
    %799 = vrot.lane.b32.xlu0 %v797, 125
    %v800 = vpop.permute.xlu0 %799
    %801 = vrot.lane.b32.xlu0 %v798, 125
    %v802 = vpop.permute.xlu0 %801
    %vm803 = vcmp.lt.s32.totalorder %v624, 125
    %v804 = vsel %vm803, %v800, %v802
    %v805 = vsel %vm803, %v802, %v800
    %v807 = vperm.slane %v610, 0
    %v808 = vperm.slane %v610, 1
    %v811 = vmul.f32 %v807, %v804
    %v812 = vmul.f32 %v808, %v805
    %v813 = vadd.f32 %v787, %v811
    %v814 = vadd.f32 %v788, %v812
    %815 = vst [vmem:[#allocation1] ss:$4 sm:$0xff] %v611
    %v816 = vld.sshfl [vmem:[#allocation1] sm:$0xff pattern:$0x73625140]
    %v817 = vld.sshfl [vmem:[#allocation1 + $0x8] sm:$0xff pattern:$0x73625140]
    %820 = vrot.lane.b32.xlu0 %v816, 32
    %v821 = vpop.permute.xlu0 %820
    %822 = vrot.lane.b32.xlu0 %v817, 32
    %v823 = vpop.permute.xlu0 %822
    %vm824 = vcmp.lt.s32.totalorder %v624, 32
    %v825 = vsel %vm824, %v821, %v823
    %v826 = vsel %vm824, %v823, %v821
    %v828 = vperm.slane %v590, 0
    %v829 = vperm.slane %v590, 1
    %v832 = vmul.f32 %v828, %v826
    %v833 = vmul.f32 %v829, %v825
    %834 = vst [vmem:[#allocation1] ss:$4 sm:$0xff] %v612
    %v835 = vld.sshfl [vmem:[#allocation1] sm:$0xff pattern:$0x73625140]
    %v836 = vld.sshfl [vmem:[#allocation1 + $0x8] sm:$0xff pattern:$0x73625140]
    %839 = vrot.lane.b32.xlu0 %v835, 32
    %v840 = vpop.permute.xlu0 %839
    %841 = vrot.lane.b32.xlu0 %v836, 32
    %v842 = vpop.permute.xlu0 %841
    %v843 = vsel %vm824, %v840, %v842
    %v844 = vsel %vm824, %v842, %v840
    %v845 = vmul.f32 %v828, %v844
    %v846 = vmul.f32 %v829, %v843
    %s847 = sld [smem:[#allocation6 + $0x7]]
    %v848 = vstv %s847
    %v849 = vmul.f32 %v848, %v832
    %v850 = vmul.f32 %v848, %v833
    %s851 = sld [smem:[#allocation6 + $0x38]]
    %v852 = vstv %s851
    %v853 = vmul.f32 %v852, %v845
    %v854 = vmul.f32 %v852, %v846
    %v855 = vadd.f32 %v849, %v853
    %v856 = vadd.f32 %v850, %v854
    %857 = vrot.lane.b32.xlu0 %v855, 3
    %v858 = vpop.permute.xlu0 %857
    %859 = vrot.lane.b32.xlu0 %v856, 3
    %v860 = vpop.permute.xlu0 %859
    %v861 = vsel %vm663, %v858, %v860
    %v862 = vsel %vm663, %v860, %v858
    %v863 = vmul.f32 %v667, %v862
    %v864 = vmul.f32 %v668, %v861
    %v865 = vadd.f32 %v813, %v863
    %v866 = vadd.f32 %v814, %v864
    %s867 = sld [smem:[#allocation6 + $0x8]]
    %v868 = vstv %s867
    %v869 = vmul.f32 %v868, %v832
    %v870 = vmul.f32 %v868, %v833
    %s871 = sld [smem:[#allocation6 + $0x39]]
    %v872 = vstv %s871
    %v873 = vmul.f32 %v872, %v845
    %v874 = vmul.f32 %v872, %v846
    %v875 = vadd.f32 %v869, %v873
    %v876 = vadd.f32 %v870, %v874
    %877 = vrot.lane.b32.xlu0 %v875, 2
    %v878 = vpop.permute.xlu0 %877
    %879 = vrot.lane.b32.xlu0 %v876, 2
    %v880 = vpop.permute.xlu0 %879
    %v881 = vsel %vm687, %v878, %v880
    %v882 = vsel %vm687, %v880, %v878
    %v883 = vmul.f32 %v691, %v882
    %v884 = vmul.f32 %v692, %v881
    %v885 = vadd.f32 %v865, %v883
    %v886 = vadd.f32 %v866, %v884
    %s887 = sld [smem:[#allocation6 + $0x9]]
    %v888 = vstv %s887
    %v889 = vmul.f32 %v888, %v832
    %v890 = vmul.f32 %v888, %v833
    %s891 = sld [smem:[#allocation6 + $0x3a]]
    %v892 = vstv %s891
    %v893 = vmul.f32 %v892, %v845
    %v894 = vmul.f32 %v892, %v846
    %v895 = vadd.f32 %v889, %v893
    %v896 = vadd.f32 %v890, %v894
    %897 = vrot.lane.b32.xlu0 %v895, 1
    %v898 = vpop.permute.xlu0 %897
    %899 = vrot.lane.b32.xlu0 %v896, 1
    %v900 = vpop.permute.xlu0 %899
    %v901 = vsel %vm713, %v898, %v900
    %v902 = vsel %vm713, %v900, %v898
    %v903 = vmul.f32 %v717, %v902
    %v904 = vmul.f32 %v718, %v901
    %v905 = vadd.f32 %v885, %v903
    %v906 = vadd.f32 %v886, %v904
    %s907 = sld [smem:[#allocation6 + $0xa]]
    %v908 = vstv %s907
    %v909 = vmul.f32 %v908, %v832
    %v910 = vmul.f32 %v908, %v833
    %s911 = sld [smem:[#allocation6 + $0x3b]]
    %v912 = vstv %s911
    %v913 = vmul.f32 %v912, %v845
    %v914 = vmul.f32 %v912, %v846
    %v915 = vadd.f32 %v909, %v913
    %v916 = vadd.f32 %v910, %v914
    %v917 = vadd.f32 %v905, %v915
    %v918 = vadd.f32 %v906, %v916
    %s919 = sld [smem:[#allocation6 + $0xb]]
    %v920 = vstv %s919
    %v921 = vmul.f32 %v920, %v832
    %v922 = vmul.f32 %v920, %v833
    %s923 = sld [smem:[#allocation6 + $0x3c]]
    %v924 = vstv %s923
    %v925 = vmul.f32 %v924, %v845
    %v926 = vmul.f32 %v924, %v846
    %v927 = vadd.f32 %v921, %v925
    %v928 = vadd.f32 %v922, %v926
    %929 = vrot.lane.b32.xlu0 %v927, 127
    %v930 = vpop.permute.xlu0 %929
    %931 = vrot.lane.b32.xlu0 %v928, 127
    %v932 = vpop.permute.xlu0 %931
    %v933 = vsel %vm751, %v930, %v932
    %v934 = vsel %vm751, %v932, %v930
    %v935 = vmul.f32 %v755, %v933
    %v936 = vmul.f32 %v756, %v934
    %v937 = vadd.f32 %v917, %v935
    %v938 = vadd.f32 %v918, %v936
    %s939 = sld [smem:[#allocation6 + $0xc]]
    %v940 = vstv %s939
    %v941 = vmul.f32 %v940, %v832
    %v942 = vmul.f32 %v940, %v833
    %s943 = sld [smem:[#allocation6 + $0x3d]]
    %v944 = vstv %s943
    %v945 = vmul.f32 %v944, %v845
    %v946 = vmul.f32 %v944, %v846
    %v947 = vadd.f32 %v941, %v945
    %v948 = vadd.f32 %v942, %v946
    %949 = vrot.lane.b32.xlu0 %v947, 126
    %v950 = vpop.permute.xlu0 %949
    %951 = vrot.lane.b32.xlu0 %v948, 126
    %v952 = vpop.permute.xlu0 %951
    %v953 = vsel %vm777, %v950, %v952
    %v954 = vsel %vm777, %v952, %v950
    %v955 = vmul.f32 %v781, %v953
    %v956 = vmul.f32 %v782, %v954
    %v957 = vadd.f32 %v937, %v955
    %v958 = vadd.f32 %v938, %v956
    %s959 = sld [smem:[#allocation6 + $0xd]]
    %v960 = vstv %s959
    %v961 = vmul.f32 %v960, %v832
    %v962 = vmul.f32 %v960, %v833
    %s963 = sld [smem:[#allocation6 + $0x3e]]
    %v964 = vstv %s963
    %v965 = vmul.f32 %v964, %v845
    %v966 = vmul.f32 %v964, %v846
    %v967 = vadd.f32 %v961, %v965
    %v968 = vadd.f32 %v962, %v966
    %969 = vrot.lane.b32.xlu0 %v967, 125
    %v970 = vpop.permute.xlu0 %969
    %971 = vrot.lane.b32.xlu0 %v968, 125
    %v972 = vpop.permute.xlu0 %971
    %v973 = vsel %vm803, %v970, %v972
    %v974 = vsel %vm803, %v972, %v970
    %v975 = vmul.f32 %v807, %v973
    %v976 = vmul.f32 %v808, %v974
    %v977 = vadd.f32 %v957, %v975
    %v978 = vadd.f32 %v958, %v976
    %979 = vst [vmem:[#allocation1] ss:$4 sm:$0xff] %v611
    %v980 = vld.sshfl [vmem:[#allocation1] sm:$0xff pattern:$0x73625140]
    %v981 = vld.sshfl [vmem:[#allocation1 + $0x8] sm:$0xff pattern:$0x73625140]
    %984 = vrot.lane.b32.xlu0 %v980, 16
    %v985 = vpop.permute.xlu0 %984
    %986 = vrot.lane.b32.xlu0 %v981, 16
    %v987 = vpop.permute.xlu0 %986
    %vm988 = vcmp.lt.s32.totalorder %v624, 16
    %v989 = vsel %vm988, %v985, %v987
    %v990 = vsel %vm988, %v987, %v985
    %v992 = vperm.slane %v592, 0
    %v993 = vperm.slane %v592, 1
    %v996 = vmul.f32 %v992, %v990
    %v997 = vmul.f32 %v993, %v989
    %998 = vst [vmem:[#allocation1] ss:$4 sm:$0xff] %v612
    %v999 = vld.sshfl [vmem:[#allocation1] sm:$0xff pattern:$0x73625140]
    %v1000 = vld.sshfl [vmem:[#allocation1 + $0x8] sm:$0xff pattern:$0x73625140]
    %1003 = vrot.lane.b32.xlu0 %v999, 16
    %v1004 = vpop.permute.xlu0 %1003
    %1005 = vrot.lane.b32.xlu0 %v1000, 16
    %v1006 = vpop.permute.xlu0 %1005
    %v1007 = vsel %vm988, %v1004, %v1006
    %v1008 = vsel %vm988, %v1006, %v1004
    %v1009 = vmul.f32 %v992, %v1008
    %v1010 = vmul.f32 %v993, %v1007
    %s1011 = sld [smem:[#allocation6 + $0xe]]
    %v1012 = vstv %s1011
    %v1013 = vmul.f32 %v1012, %v996
    %v1014 = vmul.f32 %v1012, %v997
    %s1015 = sld [smem:[#allocation6 + $0x3f]]
    %v1016 = vstv %s1015
    %v1017 = vmul.f32 %v1016, %v1009
    %v1018 = vmul.f32 %v1016, %v1010
    %v1019 = vadd.f32 %v1013, %v1017
    %v1020 = vadd.f32 %v1014, %v1018
    %1021 = vrot.lane.b32.xlu0 %v1019, 3
    %v1022 = vpop.permute.xlu0 %1021
    %1023 = vrot.lane.b32.xlu0 %v1020, 3
    %v1024 = vpop.permute.xlu0 %1023
    %v1025 = vsel %vm663, %v1022, %v1024
    %v1026 = vsel %vm663, %v1024, %v1022
    %v1027 = vmul.f32 %v667, %v1026
    %v1028 = vmul.f32 %v668, %v1025
    %v1029 = vadd.f32 %v977, %v1027
    %v1030 = vadd.f32 %v978, %v1028
    %s1031 = sld [smem:[#allocation6 + $0xf]]
    %v1032 = vstv %s1031
    %v1033 = vmul.f32 %v1032, %v996
    %v1034 = vmul.f32 %v1032, %v997
    %s1035 = sld [smem:[#allocation6 + $0x40]]
    %v1036 = vstv %s1035
    %v1037 = vmul.f32 %v1036, %v1009
    %v1038 = vmul.f32 %v1036, %v1010
    %v1039 = vadd.f32 %v1033, %v1037
    %v1040 = vadd.f32 %v1034, %v1038
    %1041 = vrot.lane.b32.xlu0 %v1039, 2
    %v1042 = vpop.permute.xlu0 %1041
    %1043 = vrot.lane.b32.xlu0 %v1040, 2
    %v1044 = vpop.permute.xlu0 %1043
    %v1045 = vsel %vm687, %v1042, %v1044
    %v1046 = vsel %vm687, %v1044, %v1042
    %v1047 = vmul.f32 %v691, %v1046
    %v1048 = vmul.f32 %v692, %v1045
    %v1049 = vadd.f32 %v1029, %v1047
    %v1050 = vadd.f32 %v1030, %v1048
    %s1051 = sld [smem:[#allocation6 + $0x10]]
    %v1052 = vstv %s1051
    %v1053 = vmul.f32 %v1052, %v996
    %v1054 = vmul.f32 %v1052, %v997
    %s1055 = sld [smem:[#allocation6 + $0x41]]
    %v1056 = vstv %s1055
    %v1057 = vmul.f32 %v1056, %v1009
    %v1058 = vmul.f32 %v1056, %v1010
    %v1059 = vadd.f32 %v1053, %v1057
    %v1060 = vadd.f32 %v1054, %v1058
    %1061 = vrot.lane.b32.xlu0 %v1059, 1
    %v1062 = vpop.permute.xlu0 %1061
    %1063 = vrot.lane.b32.xlu0 %v1060, 1
    %v1064 = vpop.permute.xlu0 %1063
    %v1065 = vsel %vm713, %v1062, %v1064
    %v1066 = vsel %vm713, %v1064, %v1062
    %v1067 = vmul.f32 %v717, %v1066
    %v1068 = vmul.f32 %v718, %v1065
    %v1069 = vadd.f32 %v1049, %v1067
    %v1070 = vadd.f32 %v1050, %v1068
    %s1071 = sld [smem:[#allocation6 + $0x11]]
    %v1072 = vstv %s1071
    %v1073 = vmul.f32 %v1072, %v996
    %v1074 = vmul.f32 %v1072, %v997
    %s1075 = sld [smem:[#allocation6 + $0x42]]
    %v1076 = vstv %s1075
    %v1077 = vmul.f32 %v1076, %v1009
    %v1078 = vmul.f32 %v1076, %v1010
    %v1079 = vadd.f32 %v1073, %v1077
    %v1080 = vadd.f32 %v1074, %v1078
    %v1081 = vadd.f32 %v1069, %v1079
    %v1082 = vadd.f32 %v1070, %v1080
    %s1083 = sld [smem:[#allocation6 + $0x12]]
    %v1084 = vstv %s1083
    %v1085 = vmul.f32 %v1084, %v996
    %v1086 = vmul.f32 %v1084, %v997
    %s1087 = sld [smem:[#allocation6 + $0x43]]
    %v1088 = vstv %s1087
    %v1089 = vmul.f32 %v1088, %v1009
    %v1090 = vmul.f32 %v1088, %v1010
    %v1091 = vadd.f32 %v1085, %v1089
    %v1092 = vadd.f32 %v1086, %v1090
    %1093 = vrot.lane.b32.xlu0 %v1091, 127
    %v1094 = vpop.permute.xlu0 %1093
    %1095 = vrot.lane.b32.xlu0 %v1092, 127
    %v1096 = vpop.permute.xlu0 %1095
    %v1097 = vsel %vm751, %v1094, %v1096
    %v1098 = vsel %vm751, %v1096, %v1094
    %v1099 = vmul.f32 %v755, %v1097
    %v1100 = vmul.f32 %v756, %v1098
    %v1101 = vadd.f32 %v1081, %v1099
    %v1102 = vadd.f32 %v1082, %v1100
    %s1103 = sld [smem:[#allocation6 + $0x13]]
    %v1104 = vstv %s1103
    %v1105 = vmul.f32 %v1104, %v996
    %v1106 = vmul.f32 %v1104, %v997
    %s1107 = sld [smem:[#allocation6 + $0x44]]
    %v1108 = vstv %s1107
    %v1109 = vmul.f32 %v1108, %v1009
    %v1110 = vmul.f32 %v1108, %v1010
    %v1111 = vadd.f32 %v1105, %v1109
    %v1112 = vadd.f32 %v1106, %v1110
    %1113 = vrot.lane.b32.xlu0 %v1111, 126
    %v1114 = vpop.permute.xlu0 %1113
    %1115 = vrot.lane.b32.xlu0 %v1112, 126
    %v1116 = vpop.permute.xlu0 %1115
    %v1117 = vsel %vm777, %v1114, %v1116
    %v1118 = vsel %vm777, %v1116, %v1114
    %v1119 = vmul.f32 %v781, %v1117
    %v1120 = vmul.f32 %v782, %v1118
    %v1121 = vadd.f32 %v1101, %v1119
    %v1122 = vadd.f32 %v1102, %v1120
    %s1123 = sld [smem:[#allocation6 + $0x14]]
    %v1124 = vstv %s1123
    %v1125 = vmul.f32 %v1124, %v996
    %v1126 = vmul.f32 %v1124, %v997
    %s1127 = sld [smem:[#allocation6 + $0x45]]
    %v1128 = vstv %s1127
    %v1129 = vmul.f32 %v1128, %v1009
    %v1130 = vmul.f32 %v1128, %v1010
    %v1131 = vadd.f32 %v1125, %v1129
    %v1132 = vadd.f32 %v1126, %v1130
    %1133 = vrot.lane.b32.xlu0 %v1131, 125
    %v1134 = vpop.permute.xlu0 %1133
    %1135 = vrot.lane.b32.xlu0 %v1132, 125
    %v1136 = vpop.permute.xlu0 %1135
    %v1137 = vsel %vm803, %v1134, %v1136
    %v1138 = vsel %vm803, %v1136, %v1134
    %v1139 = vmul.f32 %v807, %v1137
    %v1140 = vmul.f32 %v808, %v1138
    %v1141 = vadd.f32 %v1121, %v1139
    %v1142 = vadd.f32 %v1122, %v1140
    %s1143 = sld [smem:[#allocation6 + $0x15]]
    %v1144 = vstv %s1143
    %v1145 = vmul.f32 %v1144, %v611
    %s1146 = sld [smem:[#allocation6 + $0x46]]
    %v1147 = vstv %s1146
    %v1148 = vmul.f32 %v1147, %v612
    %v1149 = vadd.f32 %v1145, %v1148
    %1151 = vst [vmem:[#allocation1] ss:$4 sm:$0xff] %v1149
    %v1152 = vld.sshfl [vmem:[#allocation1] sm:$0xff pattern:$0x73625140]
    %v1153 = vld.sshfl [vmem:[#allocation1 + $0x8] sm:$0xff pattern:$0x73625140]
    %1156 = vrot.lane.b32.xlu0 %v1152, 3
    %v1157 = vpop.permute.xlu0 %1156
    %1158 = vrot.lane.b32.xlu0 %v1153, 3
    %v1159 = vpop.permute.xlu0 %1158
    %v1160 = vsel %vm663, %v1157, %v1159
    %v1161 = vsel %vm663, %v1159, %v1157
    %v1162 = vmul.f32 %v667, %v1161
    %v1163 = vmul.f32 %v668, %v1160
    %v1164 = vadd.f32 %v1141, %v1162
    %v1165 = vadd.f32 %v1142, %v1163
    %s1166 = sld [smem:[#allocation6 + $0x16]]
    %v1167 = vstv %s1166
    %v1168 = vmul.f32 %v1167, %v611
    %s1169 = sld [smem:[#allocation6 + $0x47]]
    %v1170 = vstv %s1169
    %v1171 = vmul.f32 %v1170, %v612
    %v1172 = vadd.f32 %v1168, %v1171
    %1174 = vst [vmem:[#allocation1] ss:$4 sm:$0xff] %v1172
    %v1175 = vld.sshfl [vmem:[#allocation1] sm:$0xff pattern:$0x73625140]
    %v1176 = vld.sshfl [vmem:[#allocation1 + $0x8] sm:$0xff pattern:$0x73625140]
    %1179 = vrot.lane.b32.xlu0 %v1175, 2
    %v1180 = vpop.permute.xlu0 %1179
    %1181 = vrot.lane.b32.xlu0 %v1176, 2
    %v1182 = vpop.permute.xlu0 %1181
    %v1183 = vsel %vm687, %v1180, %v1182
    %v1184 = vsel %vm687, %v1182, %v1180
    %v1185 = vmul.f32 %v691, %v1184
    %v1186 = vmul.f32 %v692, %v1183
    %v1187 = vadd.f32 %v1164, %v1185
    %v1188 = vadd.f32 %v1165, %v1186
    %s1189 = sld [smem:[#allocation6 + $0x17]]
    %v1190 = vstv %s1189
    %v1191 = vmul.f32 %v1190, %v611
    %s1192 = sld [smem:[#allocation6 + $0x48]]
    %v1193 = vstv %s1192
    %v1194 = vmul.f32 %v1193, %v612
    %v1195 = vadd.f32 %v1191, %v1194
    %1197 = vst [vmem:[#allocation1] ss:$4 sm:$0xff] %v1195
    %v1198 = vld.sshfl [vmem:[#allocation1] sm:$0xff pattern:$0x73625140]
    %v1199 = vld.sshfl [vmem:[#allocation1 + $0x8] sm:$0xff pattern:$0x73625140]
    %1202 = vrot.lane.b32.xlu0 %v1198, 1
    %v1203 = vpop.permute.xlu0 %1202
    %1204 = vrot.lane.b32.xlu0 %v1199, 1
    %v1205 = vpop.permute.xlu0 %1204
    %v1206 = vsel %vm713, %v1203, %v1205
    %v1207 = vsel %vm713, %v1205, %v1203
    %v1208 = vmul.f32 %v717, %v1207
    %v1209 = vmul.f32 %v718, %v1206
    %v1210 = vadd.f32 %v1187, %v1208
    %v1211 = vadd.f32 %v1188, %v1209
    %s1212 = sld [smem:[#allocation6 + $0x18]]
    %v1213 = vstv %s1212
    %v1214 = vmul.f32 %v1213, %v611
    %s1215 = sld [smem:[#allocation6 + $0x49]]
    %v1216 = vstv %s1215
    %v1217 = vmul.f32 %v1216, %v612
    %v1218 = vadd.f32 %v1214, %v1217
    %1220 = vst [vmem:[#allocation1] ss:$4 sm:$0xff] %v1218
    %v1221 = vld.sshfl [vmem:[#allocation1] sm:$0xff pattern:$0x73625140]
    %v1222 = vld.sshfl [vmem:[#allocation1 + $0x8] sm:$0xff pattern:$0x73625140]
    %v1225 = vadd.f32 %v1210, %v1221
    %v1226 = vadd.f32 %v1211, %v1222
    %s1227 = sld [smem:[#allocation6 + $0x19]]
    %v1228 = vstv %s1227
    %v1229 = vmul.f32 %v1228, %v611
    %s1230 = sld [smem:[#allocation6 + $0x4a]]
    %v1231 = vstv %s1230
    %v1232 = vmul.f32 %v1231, %v612
    %v1233 = vadd.f32 %v1229, %v1232
    %1235 = vst [vmem:[#allocation1] ss:$4 sm:$0xff] %v1233
    %v1236 = vld.sshfl [vmem:[#allocation1] sm:$0xff pattern:$0x73625140]
    %v1237 = vld.sshfl [vmem:[#allocation1 + $0x8] sm:$0xff pattern:$0x73625140]
    %1240 = vrot.lane.b32.xlu0 %v1236, 127
    %v1241 = vpop.permute.xlu0 %1240
    %1242 = vrot.lane.b32.xlu0 %v1237, 127
    %v1243 = vpop.permute.xlu0 %1242
    %v1244 = vsel %vm751, %v1241, %v1243
    %v1245 = vsel %vm751, %v1243, %v1241
    %v1246 = vmul.f32 %v755, %v1244
    %v1247 = vmul.f32 %v756, %v1245
    %v1248 = vadd.f32 %v1225, %v1246
    %v1249 = vadd.f32 %v1226, %v1247
    %s1250 = sld [smem:[#allocation6 + $0x1a]]
    %v1251 = vstv %s1250
    %v1252 = vmul.f32 %v1251, %v611
    %s1253 = sld [smem:[#allocation6 + $0x4b]]
    %v1254 = vstv %s1253
    %v1255 = vmul.f32 %v1254, %v612
    %v1256 = vadd.f32 %v1252, %v1255
    %1258 = vst [vmem:[#allocation1] ss:$4 sm:$0xff] %v1256
    %v1259 = vld.sshfl [vmem:[#allocation1] sm:$0xff pattern:$0x73625140]
    %v1260 = vld.sshfl [vmem:[#allocation1 + $0x8] sm:$0xff pattern:$0x73625140]
    %1263 = vrot.lane.b32.xlu0 %v1259, 126
    %v1264 = vpop.permute.xlu0 %1263
    %1265 = vrot.lane.b32.xlu0 %v1260, 126
    %v1266 = vpop.permute.xlu0 %1265
    %v1267 = vsel %vm777, %v1264, %v1266
    %v1268 = vsel %vm777, %v1266, %v1264
    %v1269 = vmul.f32 %v781, %v1267
    %v1270 = vmul.f32 %v782, %v1268
    %v1271 = vadd.f32 %v1248, %v1269
    %v1272 = vadd.f32 %v1249, %v1270
    %s1273 = sld [smem:[#allocation6 + $0x1b]]
    %v1274 = vstv %s1273
    %v1275 = vmul.f32 %v1274, %v611
    %s1276 = sld [smem:[#allocation6 + $0x4c]]
    %v1277 = vstv %s1276
    %v1278 = vmul.f32 %v1277, %v612
    %v1279 = vadd.f32 %v1275, %v1278
    %1281 = vst [vmem:[#allocation1] ss:$4 sm:$0xff] %v1279
    %v1282 = vld.sshfl [vmem:[#allocation1] sm:$0xff pattern:$0x73625140]
    %v1283 = vld.sshfl [vmem:[#allocation1 + $0x8] sm:$0xff pattern:$0x73625140]
    %1286 = vrot.lane.b32.xlu0 %v1282, 125
    %v1287 = vpop.permute.xlu0 %1286
    %1288 = vrot.lane.b32.xlu0 %v1283, 125
    %v1289 = vpop.permute.xlu0 %1288
    %v1290 = vsel %vm803, %v1287, %v1289
    %v1291 = vsel %vm803, %v1289, %v1287
    %v1292 = vmul.f32 %v807, %v1290
    %v1293 = vmul.f32 %v808, %v1291
    %v1294 = vadd.f32 %v1271, %v1292
    %v1295 = vadd.f32 %v1272, %v1293
    %1296 = vst [vmem:[#allocation1] ss:$4 sm:$0xff] %v611
    %v1297 = vld.sshfl [vmem:[#allocation1] sm:$0xff pattern:$0x73625140]
    %v1298 = vld.sshfl [vmem:[#allocation1 + $0x8] sm:$0xff pattern:$0x73625140]
    %1301 = vrot.lane.b32.xlu0 %v1297, 112
    %v1302 = vpop.permute.xlu0 %1301
    %1303 = vrot.lane.b32.xlu0 %v1298, 112
    %v1304 = vpop.permute.xlu0 %1303
    %vm1305 = vcmp.lt.s32.totalorder %v624, 112
    %v1306 = vsel %vm1305, %v1302, %v1304
    %v1307 = vsel %vm1305, %v1304, %v1302
    %v1309 = vperm.slane %v594, 0
    %v1310 = vperm.slane %v594, 1
    %v1313 = vmul.f32 %v1309, %v1306
    %v1314 = vmul.f32 %v1310, %v1307
    %1315 = vst [vmem:[#allocation1] ss:$4 sm:$0xff] %v612
    %v1316 = vld.sshfl [vmem:[#allocation1] sm:$0xff pattern:$0x73625140]
    %v1317 = vld.sshfl [vmem:[#allocation1 + $0x8] sm:$0xff pattern:$0x73625140]
    %1320 = vrot.lane.b32.xlu0 %v1316, 112
    %v1321 = vpop.permute.xlu0 %1320
    %1322 = vrot.lane.b32.xlu0 %v1317, 112
    %v1323 = vpop.permute.xlu0 %1322
    %v1324 = vsel %vm1305, %v1321, %v1323
    %v1325 = vsel %vm1305, %v1323, %v1321
    %v1326 = vmul.f32 %v1309, %v1324
    %v1327 = vmul.f32 %v1310, %v1325
    %s1328 = sld [smem:[#allocation6 + $0x1c]]
    %v1329 = vstv %s1328
    %v1330 = vmul.f32 %v1329, %v1313
    %v1331 = vmul.f32 %v1329, %v1314
    %s1332 = sld [smem:[#allocation6 + $0x4d]]
    %v1333 = vstv %s1332
    %v1334 = vmul.f32 %v1333, %v1326
    %v1335 = vmul.f32 %v1333, %v1327
    %v1336 = vadd.f32 %v1330, %v1334
    %v1337 = vadd.f32 %v1331, %v1335
    %1338 = vrot.lane.b32.xlu0 %v1336, 3
    %v1339 = vpop.permute.xlu0 %1338
    %1340 = vrot.lane.b32.xlu0 %v1337, 3
    %v1341 = vpop.permute.xlu0 %1340
    %v1342 = vsel %vm663, %v1339, %v1341
    %v1343 = vsel %vm663, %v1341, %v1339
    %v1344 = vmul.f32 %v667, %v1343
    %v1345 = vmul.f32 %v668, %v1342
    %v1346 = vadd.f32 %v1294, %v1344
    %v1347 = vadd.f32 %v1295, %v1345
    %s1348 = sld [smem:[#allocation6 + $0x1d]]
    %v1349 = vstv %s1348
    %v1350 = vmul.f32 %v1349, %v1313
    %v1351 = vmul.f32 %v1349, %v1314
    %s1352 = sld [smem:[#allocation6 + $0x4e]]
    %v1353 = vstv %s1352
    %v1354 = vmul.f32 %v1353, %v1326
    %v1355 = vmul.f32 %v1353, %v1327
    %v1356 = vadd.f32 %v1350, %v1354
    %v1357 = vadd.f32 %v1351, %v1355
    %1358 = vrot.lane.b32.xlu0 %v1356, 2
    %v1359 = vpop.permute.xlu0 %1358
    %1360 = vrot.lane.b32.xlu0 %v1357, 2
    %v1361 = vpop.permute.xlu0 %1360
    %v1362 = vsel %vm687, %v1359, %v1361
    %v1363 = vsel %vm687, %v1361, %v1359
    %v1364 = vmul.f32 %v691, %v1363
    %v1365 = vmul.f32 %v692, %v1362
    %v1366 = vadd.f32 %v1346, %v1364
    %v1367 = vadd.f32 %v1347, %v1365
    %s1368 = sld [smem:[#allocation6 + $0x1e]]
    %v1369 = vstv %s1368
    %v1370 = vmul.f32 %v1369, %v1313
    %v1371 = vmul.f32 %v1369, %v1314
    %s1372 = sld [smem:[#allocation6 + $0x4f]]
    %v1373 = vstv %s1372
    %v1374 = vmul.f32 %v1373, %v1326
    %v1375 = vmul.f32 %v1373, %v1327
    %v1376 = vadd.f32 %v1370, %v1374
    %v1377 = vadd.f32 %v1371, %v1375
    %1378 = vrot.lane.b32.xlu0 %v1376, 1
    %v1379 = vpop.permute.xlu0 %1378
    %1380 = vrot.lane.b32.xlu0 %v1377, 1
    %v1381 = vpop.permute.xlu0 %1380
    %v1382 = vsel %vm713, %v1379, %v1381
    %v1383 = vsel %vm713, %v1381, %v1379
    %v1384 = vmul.f32 %v717, %v1383
    %v1385 = vmul.f32 %v718, %v1382
    %v1386 = vadd.f32 %v1366, %v1384
    %v1387 = vadd.f32 %v1367, %v1385
    %s1388 = sld [smem:[#allocation6 + $0x1f]]
    %v1389 = vstv %s1388
    %v1390 = vmul.f32 %v1389, %v1313
    %v1391 = vmul.f32 %v1389, %v1314
    %s1392 = sld [smem:[#allocation6 + $0x50]]
    %v1393 = vstv %s1392
    %v1394 = vmul.f32 %v1393, %v1326
    %v1395 = vmul.f32 %v1393, %v1327
    %v1396 = vadd.f32 %v1390, %v1394
    %v1397 = vadd.f32 %v1391, %v1395
    %v1398 = vadd.f32 %v1386, %v1396
    %v1399 = vadd.f32 %v1387, %v1397
    %s1400 = sld [smem:[#allocation6 + $0x20]]
    %v1401 = vstv %s1400
    %v1402 = vmul.f32 %v1401, %v1313
    %v1403 = vmul.f32 %v1401, %v1314
    %s1404 = sld [smem:[#allocation6 + $0x51]]
    %v1405 = vstv %s1404
    %v1406 = vmul.f32 %v1405, %v1326
    %v1407 = vmul.f32 %v1405, %v1327
    %v1408 = vadd.f32 %v1402, %v1406
    %v1409 = vadd.f32 %v1403, %v1407
    %1410 = vrot.lane.b32.xlu0 %v1408, 127
    %v1411 = vpop.permute.xlu0 %1410
    %1412 = vrot.lane.b32.xlu0 %v1409, 127
    %v1413 = vpop.permute.xlu0 %1412
    %v1414 = vsel %vm751, %v1411, %v1413
    %v1415 = vsel %vm751, %v1413, %v1411
    %v1416 = vmul.f32 %v755, %v1414
    %v1417 = vmul.f32 %v756, %v1415
    %v1418 = vadd.f32 %v1398, %v1416
    %v1419 = vadd.f32 %v1399, %v1417
    %s1420 = sld [smem:[#allocation6 + $0x21]]
    %v1421 = vstv %s1420
    %v1422 = vmul.f32 %v1421, %v1313
    %v1423 = vmul.f32 %v1421, %v1314
    %s1424 = sld [smem:[#allocation6 + $0x52]]
    %v1425 = vstv %s1424
    %v1426 = vmul.f32 %v1425, %v1326
    %v1427 = vmul.f32 %v1425, %v1327
    %v1428 = vadd.f32 %v1422, %v1426
    %v1429 = vadd.f32 %v1423, %v1427
    %1430 = vrot.lane.b32.xlu0 %v1428, 126
    %v1431 = vpop.permute.xlu0 %1430
    %1432 = vrot.lane.b32.xlu0 %v1429, 126
    %v1433 = vpop.permute.xlu0 %1432
    %v1434 = vsel %vm777, %v1431, %v1433
    %v1435 = vsel %vm777, %v1433, %v1431
    %v1436 = vmul.f32 %v781, %v1434
    %v1437 = vmul.f32 %v782, %v1435
    %v1438 = vadd.f32 %v1418, %v1436
    %v1439 = vadd.f32 %v1419, %v1437
    %s1440 = sld [smem:[#allocation6 + $0x22]]
    %v1441 = vstv %s1440
    %v1442 = vmul.f32 %v1441, %v1313
    %v1443 = vmul.f32 %v1441, %v1314
    %s1444 = sld [smem:[#allocation6 + $0x53]]
    %v1445 = vstv %s1444
    %v1446 = vmul.f32 %v1445, %v1326
    %v1447 = vmul.f32 %v1445, %v1327
    %v1448 = vadd.f32 %v1442, %v1446
    %v1449 = vadd.f32 %v1443, %v1447
    %1450 = vrot.lane.b32.xlu0 %v1448, 125
    %v1451 = vpop.permute.xlu0 %1450
    %1452 = vrot.lane.b32.xlu0 %v1449, 125
    %v1453 = vpop.permute.xlu0 %1452
    %v1454 = vsel %vm803, %v1451, %v1453
    %v1455 = vsel %vm803, %v1453, %v1451
    %v1456 = vmul.f32 %v807, %v1454
    %v1457 = vmul.f32 %v808, %v1455
    %v1458 = vadd.f32 %v1438, %v1456
    %v1459 = vadd.f32 %v1439, %v1457
    %1460 = vst [vmem:[#allocation1] ss:$4 sm:$0xff] %v611
    %v1461 = vld.sshfl [vmem:[#allocation1] sm:$0xff pattern:$0x73625140]
    %v1462 = vld.sshfl [vmem:[#allocation1 + $0x8] sm:$0xff pattern:$0x73625140]
    %1465 = vrot.lane.b32.xlu0 %v1461, 96
    %v1466 = vpop.permute.xlu0 %1465
    %1467 = vrot.lane.b32.xlu0 %v1462, 96
    %v1468 = vpop.permute.xlu0 %1467
    %vm1469 = vcmp.lt.s32.totalorder %v624, 96
    %v1470 = vsel %vm1469, %v1466, %v1468
    %v1471 = vsel %vm1469, %v1468, %v1466
    %v1473 = vperm.slane %v596, 0
    %v1474 = vperm.slane %v596, 1
    %v1477 = vmul.f32 %v1473, %v1470
    %v1478 = vmul.f32 %v1474, %v1471
    %1479 = vst [vmem:[#allocation1] ss:$4 sm:$0xff] %v612
    %v1480 = vld.sshfl [vmem:[#allocation1] sm:$0xff pattern:$0x73625140]
    %v1481 = vld.sshfl [vmem:[#allocation1 + $0x8] sm:$0xff pattern:$0x73625140]
    %1484 = vrot.lane.b32.xlu0 %v1480, 96
    %v1485 = vpop.permute.xlu0 %1484
    %1486 = vrot.lane.b32.xlu0 %v1481, 96
    %v1487 = vpop.permute.xlu0 %1486
    %v1488 = vsel %vm1469, %v1485, %v1487
    %v1489 = vsel %vm1469, %v1487, %v1485
    %v1490 = vmul.f32 %v1473, %v1488
    %v1491 = vmul.f32 %v1474, %v1489
    %s1492 = sld [smem:[#allocation6 + $0x23]]
    %v1493 = vstv %s1492
    %v1494 = vmul.f32 %v1493, %v1477
    %v1495 = vmul.f32 %v1493, %v1478
    %s1496 = sld [smem:[#allocation6 + $0x54]]
    %v1497 = vstv %s1496
    %v1498 = vmul.f32 %v1497, %v1490
    %v1499 = vmul.f32 %v1497, %v1491
    %v1500 = vadd.f32 %v1494, %v1498
    %v1501 = vadd.f32 %v1495, %v1499
    %1502 = vrot.lane.b32.xlu0 %v1500, 3
    %v1503 = vpop.permute.xlu0 %1502
    %1504 = vrot.lane.b32.xlu0 %v1501, 3
    %v1505 = vpop.permute.xlu0 %1504
    %v1506 = vsel %vm663, %v1503, %v1505
    %v1507 = vsel %vm663, %v1505, %v1503
    %v1508 = vmul.f32 %v667, %v1507
    %v1509 = vmul.f32 %v668, %v1506
    %v1510 = vadd.f32 %v1458, %v1508
    %v1511 = vadd.f32 %v1459, %v1509
    %s1512 = sld [smem:[#allocation6 + $0x24]]
    %v1513 = vstv %s1512
    %v1514 = vmul.f32 %v1513, %v1477
    %v1515 = vmul.f32 %v1513, %v1478
    %s1516 = sld [smem:[#allocation6 + $0x55]]
    %v1517 = vstv %s1516
    %v1518 = vmul.f32 %v1517, %v1490
    %v1519 = vmul.f32 %v1517, %v1491
    %v1520 = vadd.f32 %v1514, %v1518
    %v1521 = vadd.f32 %v1515, %v1519
    %1522 = vrot.lane.b32.xlu0 %v1520, 2
    %v1523 = vpop.permute.xlu0 %1522
    %1524 = vrot.lane.b32.xlu0 %v1521, 2
    %v1525 = vpop.permute.xlu0 %1524
    %v1526 = vsel %vm687, %v1523, %v1525
    %v1527 = vsel %vm687, %v1525, %v1523
    %v1528 = vmul.f32 %v691, %v1527
    %v1529 = vmul.f32 %v692, %v1526
    %v1530 = vadd.f32 %v1510, %v1528
    %v1531 = vadd.f32 %v1511, %v1529
    %s1532 = sld [smem:[#allocation6 + $0x25]]
    %v1533 = vstv %s1532
    %v1534 = vmul.f32 %v1533, %v1477
    %v1535 = vmul.f32 %v1533, %v1478
    %s1536 = sld [smem:[#allocation6 + $0x56]]
    %v1537 = vstv %s1536
    %v1538 = vmul.f32 %v1537, %v1490
    %v1539 = vmul.f32 %v1537, %v1491
    %v1540 = vadd.f32 %v1534, %v1538
    %v1541 = vadd.f32 %v1535, %v1539
    %1542 = vrot.lane.b32.xlu0 %v1540, 1
    %v1543 = vpop.permute.xlu0 %1542
    %1544 = vrot.lane.b32.xlu0 %v1541, 1
    %v1545 = vpop.permute.xlu0 %1544
    %v1546 = vsel %vm713, %v1543, %v1545
    %v1547 = vsel %vm713, %v1545, %v1543
    %v1548 = vmul.f32 %v717, %v1547
    %v1549 = vmul.f32 %v718, %v1546
    %v1550 = vadd.f32 %v1530, %v1548
    %v1551 = vadd.f32 %v1531, %v1549
    %s1552 = sld [smem:[#allocation6 + $0x26]]
    %v1553 = vstv %s1552
    %v1554 = vmul.f32 %v1553, %v1477
    %v1555 = vmul.f32 %v1553, %v1478
    %s1556 = sld [smem:[#allocation6 + $0x57]]
    %v1557 = vstv %s1556
    %v1558 = vmul.f32 %v1557, %v1490
    %v1559 = vmul.f32 %v1557, %v1491
    %v1560 = vadd.f32 %v1554, %v1558
    %v1561 = vadd.f32 %v1555, %v1559
    %v1562 = vadd.f32 %v1550, %v1560
    %v1563 = vadd.f32 %v1551, %v1561
    %s1564 = sld [smem:[#allocation6 + $0x27]]
    %v1565 = vstv %s1564
    %v1566 = vmul.f32 %v1565, %v1477
    %v1567 = vmul.f32 %v1565, %v1478
    %s1568 = sld [smem:[#allocation6 + $0x58]]
    %v1569 = vstv %s1568
    %v1570 = vmul.f32 %v1569, %v1490
    %v1571 = vmul.f32 %v1569, %v1491
    %v1572 = vadd.f32 %v1566, %v1570
    %v1573 = vadd.f32 %v1567, %v1571
    %1574 = vrot.lane.b32.xlu0 %v1572, 127
    %v1575 = vpop.permute.xlu0 %1574
    %1576 = vrot.lane.b32.xlu0 %v1573, 127
    %v1577 = vpop.permute.xlu0 %1576
    %v1578 = vsel %vm751, %v1575, %v1577
    %v1579 = vsel %vm751, %v1577, %v1575
    %v1580 = vmul.f32 %v755, %v1578
    %v1581 = vmul.f32 %v756, %v1579
    %v1582 = vadd.f32 %v1562, %v1580
    %v1583 = vadd.f32 %v1563, %v1581
    %s1584 = sld [smem:[#allocation6 + $0x28]]
    %v1585 = vstv %s1584
    %v1586 = vmul.f32 %v1585, %v1477
    %v1587 = vmul.f32 %v1585, %v1478
    %s1588 = sld [smem:[#allocation6 + $0x59]]
    %v1589 = vstv %s1588
    %v1590 = vmul.f32 %v1589, %v1490
    %v1591 = vmul.f32 %v1589, %v1491
    %v1592 = vadd.f32 %v1586, %v1590
    %v1593 = vadd.f32 %v1587, %v1591
    %1594 = vrot.lane.b32.xlu0 %v1592, 126
    %v1595 = vpop.permute.xlu0 %1594
    %1596 = vrot.lane.b32.xlu0 %v1593, 126
    %v1597 = vpop.permute.xlu0 %1596
    %v1598 = vsel %vm777, %v1595, %v1597
    %v1599 = vsel %vm777, %v1597, %v1595
    %v1600 = vmul.f32 %v781, %v1598
    %v1601 = vmul.f32 %v782, %v1599
    %v1602 = vadd.f32 %v1582, %v1600
    %v1603 = vadd.f32 %v1583, %v1601
    %s1604 = sld [smem:[#allocation6 + $0x29]]
    %v1605 = vstv %s1604
    %v1606 = vmul.f32 %v1605, %v1477
    %v1607 = vmul.f32 %v1605, %v1478
    %s1608 = sld [smem:[#allocation6 + $0x5a]]
    %v1609 = vstv %s1608
    %v1610 = vmul.f32 %v1609, %v1490
    %v1611 = vmul.f32 %v1609, %v1491
    %v1612 = vadd.f32 %v1606, %v1610
    %v1613 = vadd.f32 %v1607, %v1611
    %1614 = vrot.lane.b32.xlu0 %v1612, 125
    %v1615 = vpop.permute.xlu0 %1614
    %1616 = vrot.lane.b32.xlu0 %v1613, 125
    %v1617 = vpop.permute.xlu0 %1616
    %v1618 = vsel %vm803, %v1615, %v1617
    %v1619 = vsel %vm803, %v1617, %v1615
    %v1620 = vmul.f32 %v807, %v1618
    %v1621 = vmul.f32 %v808, %v1619
    %v1622 = vadd.f32 %v1602, %v1620
    %v1623 = vadd.f32 %v1603, %v1621
    %1624 = vst [vmem:[#allocation1] ss:$4 sm:$0xff] %v611
    %v1625 = vld.sshfl [vmem:[#allocation1] sm:$0xff pattern:$0x73625140]
    %v1626 = vld.sshfl [vmem:[#allocation1 + $0x8] sm:$0xff pattern:$0x73625140]
    %1629 = vrot.lane.b32.xlu0 %v1625, 80
    %v1630 = vpop.permute.xlu0 %1629
    %1631 = vrot.lane.b32.xlu0 %v1626, 80
    %v1632 = vpop.permute.xlu0 %1631
    %vm1633 = vcmp.lt.s32.totalorder %v624, 80
    %v1634 = vsel %vm1633, %v1630, %v1632
    %v1635 = vsel %vm1633, %v1632, %v1630
    %v1637 = vperm.slane %v598, 0
    %v1638 = vperm.slane %v598, 1
    %v1641 = vmul.f32 %v1637, %v1634
    %v1642 = vmul.f32 %v1638, %v1635
    %1643 = vst [vmem:[#allocation1] ss:$4 sm:$0xff] %v612
    %v1644 = vld.sshfl [vmem:[#allocation1] sm:$0xff pattern:$0x73625140]
    %v1645 = vld.sshfl [vmem:[#allocation1 + $0x8] sm:$0xff pattern:$0x73625140]
    %1648 = vrot.lane.b32.xlu0 %v1644, 80
    %v1649 = vpop.permute.xlu0 %1648
    %1650 = vrot.lane.b32.xlu0 %v1645, 80
    %v1651 = vpop.permute.xlu0 %1650
    %v1652 = vsel %vm1633, %v1649, %v1651
    %v1653 = vsel %vm1633, %v1651, %v1649
    %v1654 = vmul.f32 %v1637, %v1652
    %v1655 = vmul.f32 %v1638, %v1653
    %s1656 = sld [smem:[#allocation6 + $0x2a]]
    %v1657 = vstv %s1656
    %v1658 = vmul.f32 %v1657, %v1641
    %v1659 = vmul.f32 %v1657, %v1642
    %s1660 = sld [smem:[#allocation6 + $0x5b]]
    %v1661 = vstv %s1660
    %v1662 = vmul.f32 %v1661, %v1654
    %v1663 = vmul.f32 %v1661, %v1655
    %v1664 = vadd.f32 %v1658, %v1662
    %v1665 = vadd.f32 %v1659, %v1663
    %1666 = vrot.lane.b32.xlu0 %v1664, 3
    %v1667 = vpop.permute.xlu0 %1666
    %1668 = vrot.lane.b32.xlu0 %v1665, 3
    %v1669 = vpop.permute.xlu0 %1668
    %v1670 = vsel %vm663, %v1667, %v1669
    %v1671 = vsel %vm663, %v1669, %v1667
    %v1672 = vmul.f32 %v667, %v1671
    %v1673 = vmul.f32 %v668, %v1670
    %v1674 = vadd.f32 %v1622, %v1672
    %v1675 = vadd.f32 %v1623, %v1673
    %s1676 = sld [smem:[#allocation6 + $0x2b]]
    %v1677 = vstv %s1676
    %v1678 = vmul.f32 %v1677, %v1641
    %v1679 = vmul.f32 %v1677, %v1642
    %s1680 = sld [smem:[#allocation6 + $0x5c]]
    %v1681 = vstv %s1680
    %v1682 = vmul.f32 %v1681, %v1654
    %v1683 = vmul.f32 %v1681, %v1655
    %v1684 = vadd.f32 %v1678, %v1682
    %v1685 = vadd.f32 %v1679, %v1683
    %1686 = vrot.lane.b32.xlu0 %v1684, 2
    %v1687 = vpop.permute.xlu0 %1686
    %1688 = vrot.lane.b32.xlu0 %v1685, 2
    %v1689 = vpop.permute.xlu0 %1688
    %v1690 = vsel %vm687, %v1687, %v1689
    %v1691 = vsel %vm687, %v1689, %v1687
    %v1692 = vmul.f32 %v691, %v1691
    %v1693 = vmul.f32 %v692, %v1690
    %v1694 = vadd.f32 %v1674, %v1692
    %v1695 = vadd.f32 %v1675, %v1693
    %s1696 = sld [smem:[#allocation6 + $0x2c]]
    %v1697 = vstv %s1696
    %v1698 = vmul.f32 %v1697, %v1641
    %v1699 = vmul.f32 %v1697, %v1642
    %s1700 = sld [smem:[#allocation6 + $0x5d]]
    %v1701 = vstv %s1700
    %v1702 = vmul.f32 %v1701, %v1654
    %v1703 = vmul.f32 %v1701, %v1655
    %v1704 = vadd.f32 %v1698, %v1702
    %v1705 = vadd.f32 %v1699, %v1703
    %1706 = vrot.lane.b32.xlu0 %v1704, 1
    %v1707 = vpop.permute.xlu0 %1706
    %1708 = vrot.lane.b32.xlu0 %v1705, 1
    %v1709 = vpop.permute.xlu0 %1708
    %v1710 = vsel %vm713, %v1707, %v1709
    %v1711 = vsel %vm713, %v1709, %v1707
    %v1712 = vmul.f32 %v717, %v1711
    %v1713 = vmul.f32 %v718, %v1710
    %v1714 = vadd.f32 %v1694, %v1712
    %v1715 = vadd.f32 %v1695, %v1713
    %s1716 = sld [smem:[#allocation6 + $0x2d]]
    %v1717 = vstv %s1716
    %v1718 = vmul.f32 %v1717, %v1641
    %v1719 = vmul.f32 %v1717, %v1642
    %s1720 = sld [smem:[#allocation6 + $0x5e]]
    %v1721 = vstv %s1720
    %v1722 = vmul.f32 %v1721, %v1654
    %v1723 = vmul.f32 %v1721, %v1655
    %v1724 = vadd.f32 %v1718, %v1722
    %v1725 = vadd.f32 %v1719, %v1723
    %v1726 = vadd.f32 %v1714, %v1724
    %v1727 = vadd.f32 %v1715, %v1725
    %s1728 = sld [smem:[#allocation6 + $0x2e]]
    %v1729 = vstv %s1728
    %v1730 = vmul.f32 %v1729, %v1641
    %v1731 = vmul.f32 %v1729, %v1642
    %s1732 = sld [smem:[#allocation6 + $0x5f]]
    %v1733 = vstv %s1732
    %v1734 = vmul.f32 %v1733, %v1654
    %v1735 = vmul.f32 %v1733, %v1655
    %v1736 = vadd.f32 %v1730, %v1734
    %v1737 = vadd.f32 %v1731, %v1735
    %1738 = vrot.lane.b32.xlu0 %v1736, 127
    %v1739 = vpop.permute.xlu0 %1738
    %1740 = vrot.lane.b32.xlu0 %v1737, 127
    %v1741 = vpop.permute.xlu0 %1740
    %v1742 = vsel %vm751, %v1739, %v1741
    %v1743 = vsel %vm751, %v1741, %v1739
    %v1744 = vmul.f32 %v755, %v1742
    %v1745 = vmul.f32 %v756, %v1743
    %v1746 = vadd.f32 %v1726, %v1744
    %v1747 = vadd.f32 %v1727, %v1745
    %s1748 = sld [smem:[#allocation6 + $0x2f]]
    %v1749 = vstv %s1748
    %v1750 = vmul.f32 %v1749, %v1641
    %v1751 = vmul.f32 %v1749, %v1642
    %s1752 = sld [smem:[#allocation6 + $0x60]]
    %v1753 = vstv %s1752
    %v1754 = vmul.f32 %v1753, %v1654
    %v1755 = vmul.f32 %v1753, %v1655
    %v1756 = vadd.f32 %v1750, %v1754
    %v1757 = vadd.f32 %v1751, %v1755
    %1758 = vrot.lane.b32.xlu0 %v1756, 126
    %v1759 = vpop.permute.xlu0 %1758
    %1760 = vrot.lane.b32.xlu0 %v1757, 126
    %v1761 = vpop.permute.xlu0 %1760
    %v1762 = vsel %vm777, %v1759, %v1761
    %v1763 = vsel %vm777, %v1761, %v1759
    %v1764 = vmul.f32 %v781, %v1762
    %v1765 = vmul.f32 %v782, %v1763
    %v1766 = vadd.f32 %v1746, %v1764
    %v1767 = vadd.f32 %v1747, %v1765
    %s1768 = sld [smem:[#allocation6 + $0x30]]
    %v1769 = vstv %s1768
    %v1770 = vmul.f32 %v1769, %v1641
    %v1771 = vmul.f32 %v1769, %v1642
    %s1772 = sld [smem:[#allocation6 + $0x61]]
    %v1773 = vstv %s1772
    %v1774 = vmul.f32 %v1773, %v1654
    %v1775 = vmul.f32 %v1773, %v1655
    %v1776 = vadd.f32 %v1770, %v1774
    %v1777 = vadd.f32 %v1771, %v1775
    %1778 = vrot.lane.b32.xlu0 %v1776, 125
    %v1779 = vpop.permute.xlu0 %1778
    %1780 = vrot.lane.b32.xlu0 %v1777, 125
    %v1781 = vpop.permute.xlu0 %1780
    %v1782 = vsel %vm803, %v1779, %v1781
    %v1783 = vsel %vm803, %v1781, %v1779
    %v1784 = vmul.f32 %v807, %v1782
    %v1785 = vmul.f32 %v808, %v1783
    %v1786 = vadd.f32 %v1766, %v1784
    %v1787 = vadd.f32 %v1767, %v1785
    %v1788 = vxor.u32 %v1786, 2147483648
    %v1789 = vxor.u32 %v1787, 2147483648
    %v1790 = vmul.f32 %v1788, 1.442695
    %v1791 = vpow.pop %v1790
    %v1792 = vmul.f32 %v1789, 1.442695
    %v1793 = vpow.pop %v1792
    %v1794 = vadd.f32 %v1791, 1.0
    %v1795 = vadd.f32 %v1793, 1.0
    %v1796 = vrcp.pop %v1794
    %v1797 = vmul.f32 %v1794, %v1796
    %v1798 = vsub.f32 1.0, %v1797
    %v1799 = vmul.f32 %v1796, %v1798
    %v1800 = vadd.f32 %v1796, %v1799
    %vm1801 = vweird.f32 %v1794
    %vm1802 = vweird.f32 %v1796
    %vm1803 = vmor %vm1801, %vm1802
    %v1804 = vsel %vm1803, %v1796, %v1800
    %v1805 = vand.u32 2147483647, %v1794
    %vm1806 = vcmp.eq.f32.partialorder %v1805, 8.507059e+37
    %v1807 = vand.u32 %v1794, 2147483648
    %v1808 = vor.u32 1.1754944e-38, %v1807
    %v1809 = vsel %vm1806, %v1808, %v1804
    %v1810 = vmul.f32 1.0, %v1809
    %v1811 = vrcp.pop %v1795
    %v1812 = vmul.f32 %v1795, %v1811
    %v1813 = vsub.f32 1.0, %v1812
    %v1814 = vmul.f32 %v1811, %v1813
    %v1815 = vadd.f32 %v1811, %v1814
    %vm1816 = vweird.f32 %v1795
    %vm1817 = vweird.f32 %v1811
    %vm1818 = vmor %vm1816, %vm1817
    %v1819 = vsel %vm1818, %v1811, %v1815
    %v1820 = vand.u32 2147483647, %v1795
    %vm1821 = vcmp.eq.f32.partialorder %v1820, 8.507059e+37
    %v1822 = vand.u32 %v1795, 2147483648
    %v1823 = vor.u32 1.1754944e-38, %v1822
    %v1824 = vsel %vm1821, %v1823, %v1819
    %v1825 = vmul.f32 1.0, %v1824
    %v1828 = vrot.slane %v1825, 6
    %vm1829 = vcmask 1041408
    %v1830 = vsel %vm1829, %v1810, %v1828
    %1832 = vst [vmem:[#allocation4] sm:$0xf] %v1830
    %v1833 = vld [vmem:[#allocation4] ss:$2 sm:$0x3]
    %v1834 = vld [vmem:[#allocation13] sm:$0xff]
    %v1836 = vperm.slane %v1833, 0
    %v1837 = vperm.slane %v1833, 1
    %v1838 = vrot.slane %v1837, 4
    %v1839 = vsel %vm77, %v1836, %v1838
    %v1841 = vmul.f32 %v1834, %v1839
    %1842 = vst [vmem:[#allocation13] sm:$0xff] %v1841
    %s1843 = scalar_lea.vmem [#allocation4], 1
    %v1844 = vld [vmem:[%s1843] ss:$2 sm:$0x3]
    %v1845 = vld [vmem:[%s586] sm:$0xff]
    %v1847 = vperm.slane %v1844, 0
    %v1848 = vperm.slane %v1844, 1
    %v1849 = vrot.slane %v1848, 4
    %v1850 = vsel %vm77, %v1847, %v1849
    %v1852 = vmul.f32 %v1845, %v1850
    %1853 = vst [vmem:[%s586] sm:$0xff] %v1852
    // Predicated region
    $region26: #{tpu_custom_call.1} parent=1 // pred_check
      _
    $region27: #{tpu_custom_call.1} parent=1 // pred_check_branch
      %1855 = sbr.rel (0) target = $region29
    $region28: #{tpu_custom_call.1} parent=1 // pred_region
      %1857 = vsyncadd [#allocation9], 0
      %s1858 = sshll.u32 [#allocation13], 4
      %s1859 = int_to_ptr.vmem [resolvable:$true] %s1858
      %s1860 = sshll.u32 %s4, 4
      %s1861 = int_to_ptr.hbm [resolvable:$true] %s1860
      %1866 = dma.vmem_to_hbm [thread:$0]  %s1859, 256, %s1861, [#allocation9], 128, 128, 8
    $region29: #{tpu_custom_call.1} parent=1 // pred_fallthru
      _
    // Predicated region
    $region30: #{tpu_custom_call.1} parent=1 // pred_check
      _
    $region31: #{tpu_custom_call.1} parent=1 // pred_check_branch
      %1868 = sbr.rel (0) target = $region33
    $region32: #{tpu_custom_call.1} parent=1 // pred_region
      %1870 = dma.done [#allocation9], 256
    $region33: #{tpu_custom_call.1} parent=1 // pred_fallthru
      _
    %1871 = vsyncpa [#allocation8], 1
    %1872 = vsyncpa [#allocation11], 1
    %1873 = vsyncpa [#allocation9], 1

</llo_original>
